<compile_context>
chip_gen: v5e
topology: v5e:2x2
jax: 0.10.0
libtpu: 0.0.40
codegen_flags: <defaults>
</compile_context>

<pallas_src>
import jax
import jax.numpy as jnp
from jax.experimental import pallas as pl
from jax.experimental.pallas import tpu as pltpu


def _pick_row_tile(ho, wo, c, in_b, out_b, budget_bytes=20 * (1 << 20)):
    """Largest output-row tile whose double-buffered streams fit the VMEM budget."""
    fixed = 2 * (9 * c * c * in_b) + 2 * (c * 4)           # resident weight + bias
    per_row = (2 * 3 * ((wo + 1) + wo) * c * in_b          # six input streams, x2 buffers
               + 2 * wo * c * out_b                        # output, x2 buffers
               + 2 * wo * c * 4)                           # f32 accumulator + tap temps
    avail = max(budget_bytes - fixed, 1 << 20)
    tho = int(max(1, min(avail // per_row, 256)))
    if tho >= ho:
        return int(ho)
    if tho >= 8:
        tho = (tho // 8) * 8
    return int(tho)


def _make_conv_kernel(tho, wo, c):
    def kernel(r0e, r0o, r1e, r1o, r2e, r2o, w_ref, b_ref, o_ref):
        # r*e: (1, THo, Wo+1, C) bf16   r*o: (1, THo, Wo, C) bf16
        # w_ref: (9, C, C) bf16 resident   b_ref: (1, C) f32 resident
        # o_ref: (1, THo, Wo, C)
        evens = (r0e, r1e, r2e)
        odds = (r0o, r1o, r2o)
        acc = None
        for kh in range(3):
            e = evens[kh][0]                      # (THo, Wo+1, C)
            o = odds[kh][0]                       # (THo, Wo,   C)
            taps = (e[:, 0:wo, :], o, e[:, 1:wo + 1, :])   # kw = 0, 1, 2
            for kw in range(3):
                t2d = taps[kw].reshape(tho * wo, c)
                part = jnp.dot(t2d, w_ref[kh * 3 + kw],
                               preferred_element_type=jnp.float32)
                acc = part if acc is None else acc + part
        out = acc + b_ref[...]                    # f32, (THo*Wo, C) + (1, C)
        o_ref[...] = out.reshape(1, tho, wo, c).astype(o_ref.dtype)

    return kernel


@jax.jit
def downsample_forward(x, t, weight, bias):
    """Equivalent of Downsample.forward(x, t).

    x:      (N, C, H, W)  NCHW like PyTorch
    t:      ignored (signature parity with the nn.Module)
    weight: (C, C, 3, 3)  PyTorch Conv2d layout (Cout, Cin, kH, kW)
    bias:   (C,)
    returns (N, C, Ho, Wo), Ho = (H-1)//2 + 1, Wo = (W-1)//2 + 1
    """
    del t
    N, C, H, W = x.shape
    Ho = (H - 1) // 2 + 1
    Wo = (W - 1) // 2 + 1
    out_dtype = x.dtype
    cdt = jnp.bfloat16                      # operand dtype; accumulation stays f32
    in_b = jnp.dtype(cdt).itemsize
    out_b = jnp.dtype(out_dtype).itemsize

    THo = _pick_row_tile(Ho, Wo, C, in_b, out_b)
    nt = pl.cdiv(Ho, THo)
    Ho_t = nt * THo                          # inputs padded to full tiles; output stays ragged

    # ---- glue (fused by XLA under this jit): NCHW->NHWC, zero-pad, phase views ----
    x_nhwc = jnp.transpose(x, (0, 2, 3, 1)).astype(cdt)
    pad_b = 2 * Ho_t - H                     # >= conv bottom pad; extra rows are zeros
    pad_r = max(0, 2 * Wo - W)
    xp = jnp.pad(x_nhwc, ((0, 0), (1, pad_b), (1, pad_r), (0, 0)))
    # xp: (N, 2*Ho_t + 1, >=2*Wo + 1, C)

    r0e = xp[:, 0:2 * Ho_t:2,     0:2 * Wo + 1:2, :]    # (N, Ho_t, Wo+1, C)
    r0o = xp[:, 0:2 * Ho_t:2,     1:2 * Wo:2,     :]    # (N, Ho_t, Wo,   C)
    r1e = xp[:, 1:2 * Ho_t:2,     0:2 * Wo + 1:2, :]
    r1o = xp[:, 1:2 * Ho_t:2,     1:2 * Wo:2,     :]
    r2e = xp[:, 2:2 * Ho_t + 1:2, 0:2 * Wo + 1:2, :]
    r2o = xp[:, 2:2 * Ho_t + 1:2, 1:2 * Wo:2,     :]

    # weight (Cout, Cin, kH, kW) -> (kH, kW, Cin, Cout) -> (9, Cin, Cout)
    w9 = jnp.transpose(weight, (2, 3, 1, 0)).reshape(9, C, C).astype(cdt)
    b2 = bias.reshape(1, C).astype(jnp.float32)

    # ---- specs ----
    spec_e = pl.BlockSpec((1, THo, Wo + 1, C), lambda n, i: (n, i, 0, 0))
    spec_o = pl.BlockSpec((1, THo, Wo, C), lambda n, i: (n, i, 0, 0))
    w_spec = pl.BlockSpec((9, C, C), lambda n, i: (0, 0, 0))
    b_spec = pl.BlockSpec((1, C), lambda n, i: (0, 0))
    out_spec = pl.BlockSpec((1, THo, Wo, C), lambda n, i: (n, i, 0, 0))

    # VMEM estimate (includes f32 accumulator) and a v7x-safe limit (<= 48 MiB).
    blk_in = THo * (3 * (Wo + 1) + 3 * Wo) * C * in_b
    blk_out = THo * Wo * C * out_b
    vmem_est = (2 * blk_in + 2 * blk_out
                + 2 * (9 * C * C * in_b + C * 4)
                + 2 * THo * Wo * C * 4)
    vmem_limit = int(min(48 * (1 << 20), max(32 * (1 << 20), int(1.5 * vmem_est))))

    flops = 2 * N * Ho_t * Wo * 9 * C * C
    bytes_accessed = int(
        (3 * N * Ho_t * (Wo + 1) * C + 3 * N * Ho_t * Wo * C) * in_b
        + 9 * C * C * in_b + C * 4
        + N * Ho * Wo * C * out_b)

    out_nhwc = pl.pallas_call(
        _make_conv_kernel(THo, Wo, C),
        out_shape=jax.ShapeDtypeStruct((N, Ho, Wo, C), out_dtype),
        grid=(N, nt),
        in_specs=[spec_e, spec_o, spec_e, spec_o, spec_e, spec_o, w_spec, b_spec],
        out_specs=out_spec,
        compiler_params=pltpu.CompilerParams(
            dimension_semantics=("parallel", "parallel"),
            vmem_limit_bytes=vmem_limit),
        cost_estimate=pl.CostEstimate(flops=int(flops), transcendentals=0,
                                      bytes_accessed=bytes_accessed),
    )(r0e, r0o, r1e, r1o, r2e, r2o, w9, b2)

    # Module contract is NCHW; this transpose is the only output-sized copy left.
    return jnp.transpose(out_nhwc, (0, 3, 1, 2))


if __name__ == "__main__":
    key = jax.random.PRNGKey(0)
    kx, kwt, kb, kt = jax.random.split(key, 4)

    N, C, H, W = 2, 4, 16, 16          # feature_map_size = 4
    x = jax.random.normal(kx, (N, C, H, W), dtype=jnp.float32)
    t = jax.random.normal(kt, (N, 32), dtype=jnp.float32)   # unused, as in PyTorch

    # Deterministic synthetic Conv2d parameters (shapes of nn.Conv2d(C, C, 3, 2, 1)).
    fan_in = C * 3 * 3
    bound = 1.0 / (fan_in ** 0.5)
    weight = jax.random.uniform(kwt, (C, C, 3, 3), jnp.float32, -bound, bound)
    bias = jax.random.uniform(kb, (C,), jnp.float32, -bound, bound)

    y = downsample_forward(x, t, weight, bias)
    y = jax.block_until_ready(y)

    # Reference: XLA conv on the same bf16-rounded operands the kernel consumes
    # (bf16 x bf16 products are exact in f32; only accumulation order differs).
    xr = x.astype(jnp.bfloat16).astype(jnp.float32)
    wr = weight.astype(jnp.bfloat16).astype(jnp.float32)
    y_ref = jax.lax.conv_general_dilated(
        xr, wr, window_strides=(2, 2), padding=((1, 1), (1, 1)),
        dimension_numbers=("NCHW", "OIHW", "NCHW")) + bias.reshape(1, C, 1, 1)

    assert y.shape == (N, C, H // 2, W // 2), y.shape
    max_err = float(jnp.max(jnp.abs(y - y_ref)))
    assert max_err < 5e-4, max_err

    print("KERNEL_OK")
</pallas_src>

<mosaic_0001>
module attributes {stable_mosaic.version = 11 : i64} {
  func.func @kernel(%arg0: i32, %arg1: i32, %arg2: memref<1x8x9x4xbf16, #tpu.memory_space<vmem>>, %arg3: memref<1x8x8x4xbf16, #tpu.memory_space<vmem>>, %arg4: memref<1x8x9x4xbf16, #tpu.memory_space<vmem>>, %arg5: memref<1x8x8x4xbf16, #tpu.memory_space<vmem>>, %arg6: memref<1x8x9x4xbf16, #tpu.memory_space<vmem>>, %arg7: memref<1x8x8x4xbf16, #tpu.memory_space<vmem>>, %arg8: memref<9x4x4xbf16, #tpu.memory_space<vmem>>, %arg9: memref<1x4xf32, #tpu.memory_space<vmem>>, %arg10: memref<1x8x8x4xf32, #tpu.memory_space<vmem>>) attributes {dimension_semantics = [#tpu.dimension_semantics<parallel>, #tpu.dimension_semantics<parallel>], iteration_bounds = array<i64: 2, 1>, scalar_prefetch = 0 : i64, scratch_operands = 0 : i64, tpu.core_type = #tpu.core_type<tc>, window_params = [{transform_indices = @transform_0, window_bounds = array<i64: 1, 8, 9, 4>}, {transform_indices = @transform_1, window_bounds = array<i64: 1, 8, 8, 4>}, {transform_indices = @transform_2, window_bounds = array<i64: 1, 8, 9, 4>}, {transform_indices = @transform_3, window_bounds = array<i64: 1, 8, 8, 4>}, {transform_indices = @transform_4, window_bounds = array<i64: 1, 8, 9, 4>}, {transform_indices = @transform_5, window_bounds = array<i64: 1, 8, 8, 4>}, {pipeline_mode = #tpu.pipeline_mode<synchronous>, transform_indices = @transform_6, window_bounds = array<i64: 9, 4, 4>}, {pipeline_mode = #tpu.pipeline_mode<synchronous>, transform_indices = @transform_7, window_bounds = array<i64: 1, 4>}, {transform_indices = @transform_8, window_bounds = array<i64: 1, 8, 8, 4>}]} {
    %c0 = arith.constant 0 : index
    %c0_0 = arith.constant 0 : index
    %c0_1 = arith.constant 0 : index
    %c0_2 = arith.constant 0 : index
    %0 = vector.load %arg2[%c0, %c0_0, %c0_1, %c0_2] : memref<1x8x9x4xbf16, #tpu.memory_space<vmem>>, vector<1x8x9x4xbf16>
    %1 = vector.shape_cast %0 : vector<1x8x9x4xbf16> to vector<8x9x4xbf16>
    %c0_3 = arith.constant 0 : index
    %c0_4 = arith.constant 0 : index
    %c0_5 = arith.constant 0 : index
    %c0_6 = arith.constant 0 : index
    %2 = vector.load %arg3[%c0_3, %c0_4, %c0_5, %c0_6] : memref<1x8x8x4xbf16, #tpu.memory_space<vmem>>, vector<1x8x8x4xbf16>
    %3 = vector.shape_cast %2 : vector<1x8x8x4xbf16> to vector<8x8x4xbf16>
    %4 = vector.extract_strided_slice %1 {offsets = [0, 0, 0], sizes = [8, 8, 4], strides = [1, 1, 1]} : vector<8x9x4xbf16> to vector<8x8x4xbf16>
    %5 = vector.extract_strided_slice %1 {offsets = [0, 1, 0], sizes = [8, 8, 4], strides = [1, 1, 1]} : vector<8x9x4xbf16> to vector<8x8x4xbf16>
    %6 = vector.shape_cast %4 : vector<8x8x4xbf16> to vector<64x4xbf16>
    %c0_7 = arith.constant 0 : index
    %c0_8 = arith.constant 0 : index
    %c0_9 = arith.constant 0 : index
    %7 = vector.load %arg8[%c0_7, %c0_8, %c0_9] : memref<9x4x4xbf16, #tpu.memory_space<vmem>>, vector<1x4x4xbf16>
    %8 = vector.shape_cast %7 : vector<1x4x4xbf16> to vector<4x4xbf16>
    %cst = arith.constant dense<0.000000e+00> : vector<64x4xf32>
    %9 = tpu.matmul %6, %8, %cst {dimension_numbers = #tpu.dot_dimension_numbers<[1], [0], [0], [1], [0, 0, 1, 1], [], []>} : vector<64x4xbf16>, vector<4x4xbf16>, vector<64x4xf32> -> vector<64x4xf32>
    %10 = vector.shape_cast %3 : vector<8x8x4xbf16> to vector<64x4xbf16>
    %c1 = arith.constant 1 : index
    %c0_10 = arith.constant 0 : index
    %c0_11 = arith.constant 0 : index
    %11 = vector.load %arg8[%c1, %c0_10, %c0_11] : memref<9x4x4xbf16, #tpu.memory_space<vmem>>, vector<1x4x4xbf16>
    %12 = vector.shape_cast %11 : vector<1x4x4xbf16> to vector<4x4xbf16>
    %cst_12 = arith.constant dense<0.000000e+00> : vector<64x4xf32>
    %13 = tpu.matmul %10, %12, %cst_12 {dimension_numbers = #tpu.dot_dimension_numbers<[1], [0], [0], [1], [0, 0, 1, 1], [], []>} : vector<64x4xbf16>, vector<4x4xbf16>, vector<64x4xf32> -> vector<64x4xf32>
    %14 = arith.addf %9, %13 : vector<64x4xf32>
    %15 = vector.shape_cast %5 : vector<8x8x4xbf16> to vector<64x4xbf16>
    %c2 = arith.constant 2 : index
    %c0_13 = arith.constant 0 : index
    %c0_14 = arith.constant 0 : index
    %16 = vector.load %arg8[%c2, %c0_13, %c0_14] : memref<9x4x4xbf16, #tpu.memory_space<vmem>>, vector<1x4x4xbf16>
    %17 = vector.shape_cast %16 : vector<1x4x4xbf16> to vector<4x4xbf16>
    %cst_15 = arith.constant dense<0.000000e+00> : vector<64x4xf32>
    %18 = tpu.matmul %15, %17, %cst_15 {dimension_numbers = #tpu.dot_dimension_numbers<[1], [0], [0], [1], [0, 0, 1, 1], [], []>} : vector<64x4xbf16>, vector<4x4xbf16>, vector<64x4xf32> -> vector<64x4xf32>
    %19 = arith.addf %14, %18 : vector<64x4xf32>
    %c0_16 = arith.constant 0 : index
    %c0_17 = arith.constant 0 : index
    %c0_18 = arith.constant 0 : index
    %c0_19 = arith.constant 0 : index
    %20 = vector.load %arg4[%c0_16, %c0_17, %c0_18, %c0_19] : memref<1x8x9x4xbf16, #tpu.memory_space<vmem>>, vector<1x8x9x4xbf16>
    %21 = vector.shape_cast %20 : vector<1x8x9x4xbf16> to vector<8x9x4xbf16>
    %c0_20 = arith.constant 0 : index
    %c0_21 = arith.constant 0 : index
    %c0_22 = arith.constant 0 : index
    %c0_23 = arith.constant 0 : index
    %22 = vector.load %arg5[%c0_20, %c0_21, %c0_22, %c0_23] : memref<1x8x8x4xbf16, #tpu.memory_space<vmem>>, vector<1x8x8x4xbf16>
    %23 = vector.shape_cast %22 : vector<1x8x8x4xbf16> to vector<8x8x4xbf16>
    %24 = vector.extract_strided_slice %21 {offsets = [0, 0, 0], sizes = [8, 8, 4], strides = [1, 1, 1]} : vector<8x9x4xbf16> to vector<8x8x4xbf16>
    %25 = vector.extract_strided_slice %21 {offsets = [0, 1, 0], sizes = [8, 8, 4], strides = [1, 1, 1]} : vector<8x9x4xbf16> to vector<8x8x4xbf16>
    %26 = vector.shape_cast %24 : vector<8x8x4xbf16> to vector<64x4xbf16>
    %c3 = arith.constant 3 : index
    %c0_24 = arith.constant 0 : index
    %c0_25 = arith.constant 0 : index
    %27 = vector.load %arg8[%c3, %c0_24, %c0_25] : memref<9x4x4xbf16, #tpu.memory_space<vmem>>, vector<1x4x4xbf16>
    %28 = vector.shape_cast %27 : vector<1x4x4xbf16> to vector<4x4xbf16>
    %cst_26 = arith.constant dense<0.000000e+00> : vector<64x4xf32>
    %29 = tpu.matmul %26, %28, %cst_26 {dimension_numbers = #tpu.dot_dimension_numbers<[1], [0], [0], [1], [0, 0, 1, 1], [], []>} : vector<64x4xbf16>, vector<4x4xbf16>, vector<64x4xf32> -> vector<64x4xf32>
    %30 = arith.addf %19, %29 : vector<64x4xf32>
    %31 = vector.shape_cast %23 : vector<8x8x4xbf16> to vector<64x4xbf16>
    %c4 = arith.constant 4 : index
    %c0_27 = arith.constant 0 : index
    %c0_28 = arith.constant 0 : index
    %32 = vector.load %arg8[%c4, %c0_27, %c0_28] : memref<9x4x4xbf16, #tpu.memory_space<vmem>>, vector<1x4x4xbf16>
    %33 = vector.shape_cast %32 : vector<1x4x4xbf16> to vector<4x4xbf16>
    %cst_29 = arith.constant dense<0.000000e+00> : vector<64x4xf32>
    %34 = tpu.matmul %31, %33, %cst_29 {dimension_numbers = #tpu.dot_dimension_numbers<[1], [0], [0], [1], [0, 0, 1, 1], [], []>} : vector<64x4xbf16>, vector<4x4xbf16>, vector<64x4xf32> -> vector<64x4xf32>
    %35 = arith.addf %30, %34 : vector<64x4xf32>
    %36 = vector.shape_cast %25 : vector<8x8x4xbf16> to vector<64x4xbf16>
    %c5 = arith.constant 5 : index
    %c0_30 = arith.constant 0 : index
    %c0_31 = arith.constant 0 : index
    %37 = vector.load %arg8[%c5, %c0_30, %c0_31] : memref<9x4x4xbf16, #tpu.memory_space<vmem>>, vector<1x4x4xbf16>
    %38 = vector.shape_cast %37 : vector<1x4x4xbf16> to vector<4x4xbf16>
    %cst_32 = arith.constant dense<0.000000e+00> : vector<64x4xf32>
    %39 = tpu.matmul %36, %38, %cst_32 {dimension_numbers = #tpu.dot_dimension_numbers<[1], [0], [0], [1], [0, 0, 1, 1], [], []>} : vector<64x4xbf16>, vector<4x4xbf16>, vector<64x4xf32> -> vector<64x4xf32>
    %40 = arith.addf %35, %39 : vector<64x4xf32>
    %c0_33 = arith.constant 0 : index
    %c0_34 = arith.constant 0 : index
    %c0_35 = arith.constant 0 : index
    %c0_36 = arith.constant 0 : index
    %41 = vector.load %arg6[%c0_33, %c0_34, %c0_35, %c0_36] : memref<1x8x9x4xbf16, #tpu.memory_space<vmem>>, vector<1x8x9x4xbf16>
    %42 = vector.shape_cast %41 : vector<1x8x9x4xbf16> to vector<8x9x4xbf16>
    %c0_37 = arith.constant 0 : index
    %c0_38 = arith.constant 0 : index
    %c0_39 = arith.constant 0 : index
    %c0_40 = arith.constant 0 : index
    %43 = vector.load %arg7[%c0_37, %c0_38, %c0_39, %c0_40] : memref<1x8x8x4xbf16, #tpu.memory_space<vmem>>, vector<1x8x8x4xbf16>
    %44 = vector.shape_cast %43 : vector<1x8x8x4xbf16> to vector<8x8x4xbf16>
    %45 = vector.extract_strided_slice %42 {offsets = [0, 0, 0], sizes = [8, 8, 4], strides = [1, 1, 1]} : vector<8x9x4xbf16> to vector<8x8x4xbf16>
    %46 = vector.extract_strided_slice %42 {offsets = [0, 1, 0], sizes = [8, 8, 4], strides = [1, 1, 1]} : vector<8x9x4xbf16> to vector<8x8x4xbf16>
    %47 = vector.shape_cast %45 : vector<8x8x4xbf16> to vector<64x4xbf16>
    %c6 = arith.constant 6 : index
    %c0_41 = arith.constant 0 : index
    %c0_42 = arith.constant 0 : index
    %48 = vector.load %arg8[%c6, %c0_41, %c0_42] : memref<9x4x4xbf16, #tpu.memory_space<vmem>>, vector<1x4x4xbf16>
    %49 = vector.shape_cast %48 : vector<1x4x4xbf16> to vector<4x4xbf16>
    %cst_43 = arith.constant dense<0.000000e+00> : vector<64x4xf32>
    %50 = tpu.matmul %47, %49, %cst_43 {dimension_numbers = #tpu.dot_dimension_numbers<[1], [0], [0], [1], [0, 0, 1, 1], [], []>} : vector<64x4xbf16>, vector<4x4xbf16>, vector<64x4xf32> -> vector<64x4xf32>
    %51 = arith.addf %40, %50 : vector<64x4xf32>
    %52 = vector.shape_cast %44 : vector<8x8x4xbf16> to vector<64x4xbf16>
    %c7 = arith.constant 7 : index
    %c0_44 = arith.constant 0 : index
    %c0_45 = arith.constant 0 : index
    %53 = vector.load %arg8[%c7, %c0_44, %c0_45] : memref<9x4x4xbf16, #tpu.memory_space<vmem>>, vector<1x4x4xbf16>
    %54 = vector.shape_cast %53 : vector<1x4x4xbf16> to vector<4x4xbf16>
    %cst_46 = arith.constant dense<0.000000e+00> : vector<64x4xf32>
    %55 = tpu.matmul %52, %54, %cst_46 {dimension_numbers = #tpu.dot_dimension_numbers<[1], [0], [0], [1], [0, 0, 1, 1], [], []>} : vector<64x4xbf16>, vector<4x4xbf16>, vector<64x4xf32> -> vector<64x4xf32>
    %56 = arith.addf %51, %55 : vector<64x4xf32>
    %57 = vector.shape_cast %46 : vector<8x8x4xbf16> to vector<64x4xbf16>
    %c8 = arith.constant 8 : index
    %c0_47 = arith.constant 0 : index
    %c0_48 = arith.constant 0 : index
    %58 = vector.load %arg8[%c8, %c0_47, %c0_48] : memref<9x4x4xbf16, #tpu.memory_space<vmem>>, vector<1x4x4xbf16>
    %59 = vector.shape_cast %58 : vector<1x4x4xbf16> to vector<4x4xbf16>
    %cst_49 = arith.constant dense<0.000000e+00> : vector<64x4xf32>
    %60 = tpu.matmul %57, %59, %cst_49 {dimension_numbers = #tpu.dot_dimension_numbers<[1], [0], [0], [1], [0, 0, 1, 1], [], []>} : vector<64x4xbf16>, vector<4x4xbf16>, vector<64x4xf32> -> vector<64x4xf32>
    %61 = arith.addf %56, %60 : vector<64x4xf32>
    %c0_50 = arith.constant 0 : index
    %c0_51 = arith.constant 0 : index
    %62 = vector.load %arg9[%c0_50, %c0_51] : memref<1x4xf32, #tpu.memory_space<vmem>>, vector<1x4xf32>
    %63 = vector.broadcast %62 : vector<1x4xf32> to vector<64x4xf32>
    %64 = arith.addf %61, %63 : vector<64x4xf32>
    %65 = vector.shape_cast %64 : vector<64x4xf32> to vector<1x8x8x4xf32>
    %c0_52 = arith.constant 0 : index
    %c0_53 = arith.constant 0 : index
    %c0_54 = arith.constant 0 : index
    %c0_55 = arith.constant 0 : index
    %66 = vector.load %arg10[%c0_52, %c0_53, %c0_54, %c0_55] : memref<1x8x8x4xf32, #tpu.memory_space<vmem>>, vector<1x8x8x4xf32>
    tpu.vector_store %arg10[%c0_52, %c0_53, %c0_54, %c0_55], %65 {strides = array<i32>} : memref<1x8x8x4xf32, #tpu.memory_space<vmem>>, vector<1x8x8x4xf32>,
    return
  }
  func.func @transform_0(%arg0: i32, %arg1: i32) -> (i32, i32, i32, i32) {
    %c0_i32 = arith.constant 0 : i32
    %c0_i32_0 = arith.constant 0 : i32
    %c0_i32_1 = arith.constant 0 : i32
    return %arg0, %arg1, %c0_i32, %c0_i32_0 : i32, i32, i32, i32
  }
  func.func @transform_1(%arg0: i32, %arg1: i32) -> (i32, i32, i32, i32) {
    %c0_i32 = arith.constant 0 : i32
    %c0_i32_0 = arith.constant 0 : i32
    %c0_i32_1 = arith.constant 0 : i32
    return %arg0, %arg1, %c0_i32, %c0_i32_0 : i32, i32, i32, i32
  }
  func.func @transform_2(%arg0: i32, %arg1: i32) -> (i32, i32, i32, i32) {
    %c0_i32 = arith.constant 0 : i32
    %c0_i32_0 = arith.constant 0 : i32
    %c0_i32_1 = arith.constant 0 : i32
    return %arg0, %arg1, %c0_i32, %c0_i32_0 : i32, i32, i32, i32
  }
  func.func @transform_3(%arg0: i32, %arg1: i32) -> (i32, i32, i32, i32) {
    %c0_i32 = arith.constant 0 : i32
    %c0_i32_0 = arith.constant 0 : i32
    %c0_i32_1 = arith.constant 0 : i32
    return %arg0, %arg1, %c0_i32, %c0_i32_0 : i32, i32, i32, i32
  }
  func.func @transform_4(%arg0: i32, %arg1: i32) -> (i32, i32, i32, i32) {
    %c0_i32 = arith.constant 0 : i32
    %c0_i32_0 = arith.constant 0 : i32
    %c0_i32_1 = arith.constant 0 : i32
    return %arg0, %arg1, %c0_i32, %c0_i32_0 : i32, i32, i32, i32
  }
  func.func @transform_5(%arg0: i32, %arg1: i32) -> (i32, i32, i32, i32) {
    %c0_i32 = arith.constant 0 : i32
    %c0_i32_0 = arith.constant 0 : i32
    %c0_i32_1 = arith.constant 0 : i32
    return %arg0, %arg1, %c0_i32, %c0_i32_0 : i32, i32, i32, i32
  }
  func.func @transform_6(%arg0: i32, %arg1: i32) -> (i32, i32, i32) {
    %c0_i32 = arith.constant 0 : i32
    %c0_i32_0 = arith.constant 0 : i32
    %c0_i32_1 = arith.constant 0 : i32
    %c0_i32_2 = arith.constant 0 : i32
    return %c0_i32, %c0_i32_0, %c0_i32_1 : i32, i32, i32
  }
  func.func @transform_7(%arg0: i32, %arg1: i32) -> (i32, i32) {
    %c0_i32 = arith.constant 0 : i32
    %c0_i32_0 = arith.constant 0 : i32
    %c0_i32_1 = arith.constant 0 : i32
    return %c0_i32, %c0_i32_0 : i32, i32
  }
  func.func @transform_8(%arg0: i32, %arg1: i32) -> (i32, i32, i32, i32) {
    %c0_i32 = arith.constant 0 : i32
    %c0_i32_0 = arith.constant 0 : i32
    %c0_i32_1 = arith.constant 0 : i32
    return %arg0, %arg1, %c0_i32, %c0_i32_0 : i32, i32, i32, i32
  }
}

</mosaic_0001>

<llo_original>
// kernel: downsample_forward.1
$region0: #{downsample_forward.1}
  #allocation0 [shape = 'u32[]', space=smem, size = 0x4, offset = 0x4, fixed_abs, tag = 'smem constant byte address 0x4 - core index']
  #allocation1 [shape = 'u32[72,128]{1,0:T(1,128)}', space=vmem, size = 0x9000, scoped, tag = 'internal scratch']
  %s0 = inlined_call_operand.vmem [shape: bf16[2,8,9,4], index: 0, kind: input, shape index: {}]
  %s1 = inlined_call_operand.vmem [shape: bf16[2,8,8,4], index: 1, kind: input, shape index: {}]
  %s2 = inlined_call_operand.vmem [shape: bf16[2,8,9,4], index: 2, kind: input, shape index: {}]
  %s3 = inlined_call_operand.vmem [shape: bf16[2,8,8,4], index: 3, kind: input, shape index: {}]
  %s4 = inlined_call_operand.vmem [shape: bf16[2,8,9,4], index: 4, kind: input, shape index: {}]
  %s5 = inlined_call_operand.vmem [shape: bf16[2,8,8,4], index: 5, kind: input, shape index: {}]
  %s6 = inlined_call_operand.vmem [shape: bf16[9,4,4], index: 6, kind: input, shape index: {}]
  %s7 = inlined_call_operand.vmem [shape: f32[1,4], index: 7, kind: input, shape index: {}]
  %s8 = inlined_call_operand.vmem [shape: f32[2,8,8,4], index: 8, kind: output, shape index: {}]
  %s9 = sld [smem:[#allocation0]]
  $region65: #{downsample_forward.1} parent=0
    _
  %s11 = ssub.s32 1, %s9
  %s12 = scalar_select 0, %s11, %s9
  loop: start=0, step=1, limit=4
  $region2: #{downsample_forward.1} parent=0 // loop_pre_header
    _
  $region3: #{downsample_forward.1} parent=0 // loop_header
    %s14 = sphi 0, %s18
    %p15 = scmp.ge.s32.totalorder %s14, 4
    %s21 = sphi 0, %s33
    %s22 = sphi 0, %s29
    %s23 = sphi 0, %s21
    %s24 = sphi 0, %s22
    %s25 = sphi 0, %s23
    %s26 = sphi 0, %s24
    %s38 = sphi 0, %s40
    %s41 = sphi 0, %s38
    %s42 = sphi 0, %s41
    %s58 = sphi 0, %s42
    %s66 = sphi 0, %s68
    %s69 = sphi 0, %s66
    %s70 = sphi 0, %s69
    %s86 = sphi 0, %s70
    %s94 = sphi 0, %s96
    %s97 = sphi 0, %s94
    %s98 = sphi 0, %s97
    %s114 = sphi 0, %s98
    %s122 = sphi 0, %s124
    %s125 = sphi 0, %s122
    %s126 = sphi 0, %s125
    %s142 = sphi 0, %s126
    %s150 = sphi 0, %s152
    %s153 = sphi 0, %s150
    %s154 = sphi 0, %s153
    %s170 = sphi 0, %s154
    %s178 = sphi 0, %s180
    %s181 = sphi 0, %s178
    %s182 = sphi 0, %s181
    %s198 = sphi 0, %s182
    %s202 = sphi 0, %s202
    %s204 = sphi 0, %s202
    %s205 = sphi 0, %s204
    %s219 = sphi 0, %s205
    %s223 = sphi 0, %s223
    %s225 = sphi 0, %s223
    %s226 = sphi 0, %s225
    %s240 = sphi 0, %s226
    %s248 = sphi 0, %s250
    %s251 = sphi 0, %s248
    %s252 = sphi 0, %s251
    %s268 = sphi 0, %s252
  $region4: #{downsample_forward.1} parent=0 // loop_header_branch
    %17 = sbr.rel (%p15) target = $region8
  $region5: #{downsample_forward.1} parent=0 // loop_body
    %s19 = ssub.s32 %s14, 1
    %s20 = ssub.s32 %s14, 2
    %s27 = sadd.s32 1, %s22
    %p28 = scmp.ge.s32.totalorder %s27, 1
    %s29 = scalar_select %p28, 0, %s27
    %s30 = sadd.s32 1, %s21
    %s31 = scalar_select %p28, %s30, %s21
    %p32 = scmp.ge.s32.totalorder %s31, 2
    %s33 = scalar_select %p32, 0, %s31
    %s34 = ssub.s32 %s21, %s33
    %s35 = ssub.s32 %s22, %s29
    %s36 = sor.u32 %s34, %s35
    %p37 = scmp.eq.s32.totalorder %s36, 0
    %s39 = sadd.s32 %s38, 1
    %s40 = scalar_select %p37, %s38, %s39
    %p43 = pneg %p37
    %p44 = scmp.eq.s32.totalorder %s14, 1
    %p45 = por %p43, %p44
    %p46 = scmp.ne.s32.totalorder %s38, %s41
    %p47 = scmp.eq.s32.totalorder %s14, 0
    %p48 = por %p46, %p47
    %p49 = scmp.ne.s32.totalorder %s38, %s41
    %p50 = scmp.eq.s32.totalorder %s19, 1
    %p51 = por %p49, %p50
    %p52 = scmp.ne.s32.totalorder %s41, %s42
    %p53 = scmp.eq.s32.totalorder %s19, 0
    %p54 = por %p52, %p53
    %p55 = scmp.ne.s32.totalorder %s41, %s42
    %p56 = scmp.eq.s32.totalorder %s20, 1
    %p57 = por %p55, %p56
    %p59 = scmp.ne.s32.totalorder %s42, %s58
    %p60 = scmp.eq.s32.totalorder %s20, 0
    %p61 = por %p59, %p60
    %s62 = ssub.s32 %s21, %s33
    %s63 = ssub.s32 %s22, %s29
    %s64 = sor.u32 %s62, %s63
    %p65 = scmp.eq.s32.totalorder %s64, 0
    %s67 = sadd.s32 %s66, 1
    %s68 = scalar_select %p65, %s66, %s67
    %p71 = pneg %p65
    %p72 = scmp.eq.s32.totalorder %s14, 1
    %p73 = por %p71, %p72
    %p74 = scmp.ne.s32.totalorder %s66, %s69
    %p75 = scmp.eq.s32.totalorder %s14, 0
    %p76 = por %p74, %p75
    %p77 = scmp.ne.s32.totalorder %s66, %s69
    %p78 = scmp.eq.s32.totalorder %s19, 1
    %p79 = por %p77, %p78
    %p80 = scmp.ne.s32.totalorder %s69, %s70
    %p81 = scmp.eq.s32.totalorder %s19, 0
    %p82 = por %p80, %p81
    %p83 = scmp.ne.s32.totalorder %s69, %s70
    %p84 = scmp.eq.s32.totalorder %s20, 1
    %p85 = por %p83, %p84
    %p87 = scmp.ne.s32.totalorder %s70, %s86
    %p88 = scmp.eq.s32.totalorder %s20, 0
    %p89 = por %p87, %p88
    %s90 = ssub.s32 %s21, %s33
    %s91 = ssub.s32 %s22, %s29
    %s92 = sor.u32 %s90, %s91
    %p93 = scmp.eq.s32.totalorder %s92, 0
    %s95 = sadd.s32 %s94, 1
    %s96 = scalar_select %p93, %s94, %s95
    %p99 = pneg %p93
    %p100 = scmp.eq.s32.totalorder %s14, 1
    %p101 = por %p99, %p100
    %p102 = scmp.ne.s32.totalorder %s94, %s97
    %p103 = scmp.eq.s32.totalorder %s14, 0
    %p104 = por %p102, %p103
    %p105 = scmp.ne.s32.totalorder %s94, %s97
    %p106 = scmp.eq.s32.totalorder %s19, 1
    %p107 = por %p105, %p106
    %p108 = scmp.ne.s32.totalorder %s97, %s98
    %p109 = scmp.eq.s32.totalorder %s19, 0
    %p110 = por %p108, %p109
    %p111 = scmp.ne.s32.totalorder %s97, %s98
    %p112 = scmp.eq.s32.totalorder %s20, 1
    %p113 = por %p111, %p112
    %p115 = scmp.ne.s32.totalorder %s98, %s114
    %p116 = scmp.eq.s32.totalorder %s20, 0
    %p117 = por %p115, %p116
    %s118 = ssub.s32 %s21, %s33
    %s119 = ssub.s32 %s22, %s29
    %s120 = sor.u32 %s118, %s119
    %p121 = scmp.eq.s32.totalorder %s120, 0
    %s123 = sadd.s32 %s122, 1
    %s124 = scalar_select %p121, %s122, %s123
    %p127 = pneg %p121
    %p128 = scmp.eq.s32.totalorder %s14, 1
    %p129 = por %p127, %p128
    %p130 = scmp.ne.s32.totalorder %s122, %s125
    %p131 = scmp.eq.s32.totalorder %s14, 0
    %p132 = por %p130, %p131
    %p133 = scmp.ne.s32.totalorder %s122, %s125
    %p134 = scmp.eq.s32.totalorder %s19, 1
    %p135 = por %p133, %p134
    %p136 = scmp.ne.s32.totalorder %s125, %s126
    %p137 = scmp.eq.s32.totalorder %s19, 0
    %p138 = por %p136, %p137
    %p139 = scmp.ne.s32.totalorder %s125, %s126
    %p140 = scmp.eq.s32.totalorder %s20, 1
    %p141 = por %p139, %p140
    %p143 = scmp.ne.s32.totalorder %s126, %s142
    %p144 = scmp.eq.s32.totalorder %s20, 0
    %p145 = por %p143, %p144
    %s146 = ssub.s32 %s21, %s33
    %s147 = ssub.s32 %s22, %s29
    %s148 = sor.u32 %s146, %s147
    %p149 = scmp.eq.s32.totalorder %s148, 0
    %s151 = sadd.s32 %s150, 1
    %s152 = scalar_select %p149, %s150, %s151
    %p155 = pneg %p149
    %p156 = scmp.eq.s32.totalorder %s14, 1
    %p157 = por %p155, %p156
    %p158 = scmp.ne.s32.totalorder %s150, %s153
    %p159 = scmp.eq.s32.totalorder %s14, 0
    %p160 = por %p158, %p159
    %p161 = scmp.ne.s32.totalorder %s150, %s153
    %p162 = scmp.eq.s32.totalorder %s19, 1
    %p163 = por %p161, %p162
    %p164 = scmp.ne.s32.totalorder %s153, %s154
    %p165 = scmp.eq.s32.totalorder %s19, 0
    %p166 = por %p164, %p165
    %p167 = scmp.ne.s32.totalorder %s153, %s154
    %p168 = scmp.eq.s32.totalorder %s20, 1
    %p169 = por %p167, %p168
    %p171 = scmp.ne.s32.totalorder %s154, %s170
    %p172 = scmp.eq.s32.totalorder %s20, 0
    %p173 = por %p171, %p172
    %s174 = ssub.s32 %s21, %s33
    %s175 = ssub.s32 %s22, %s29
    %s176 = sor.u32 %s174, %s175
    %p177 = scmp.eq.s32.totalorder %s176, 0
    %s179 = sadd.s32 %s178, 1
    %s180 = scalar_select %p177, %s178, %s179
    %p183 = pneg %p177
    %p184 = scmp.eq.s32.totalorder %s14, 1
    %p185 = por %p183, %p184
    %p186 = scmp.ne.s32.totalorder %s178, %s181
    %p187 = scmp.eq.s32.totalorder %s14, 0
    %p188 = por %p186, %p187
    %p189 = scmp.ne.s32.totalorder %s178, %s181
    %p190 = scmp.eq.s32.totalorder %s19, 1
    %p191 = por %p189, %p190
    %p192 = scmp.ne.s32.totalorder %s181, %s182
    %p193 = scmp.eq.s32.totalorder %s19, 0
    %p194 = por %p192, %p193
    %p195 = scmp.ne.s32.totalorder %s181, %s182
    %p196 = scmp.eq.s32.totalorder %s20, 1
    %p197 = por %p195, %p196
    %p199 = scmp.ne.s32.totalorder %s182, %s198
    %p200 = scmp.eq.s32.totalorder %s20, 0
    %p201 = por %p199, %p200
    %s203 = sadd.s32 %s202, 1
    %p206 = scmp.eq.s32.totalorder %s14, 1
    %p207 = scmp.ne.s32.totalorder %s202, %s204
    %p208 = scmp.eq.s32.totalorder %s14, 0
    %p209 = por %p207, %p208
    %p210 = scmp.ne.s32.totalorder %s202, %s204
    %p211 = scmp.eq.s32.totalorder %s19, 1
    %p212 = por %p210, %p211
    %p213 = scmp.ne.s32.totalorder %s204, %s205
    %p214 = scmp.eq.s32.totalorder %s19, 0
    %p215 = por %p213, %p214
    %p216 = scmp.ne.s32.totalorder %s204, %s205
    %p217 = scmp.eq.s32.totalorder %s20, 1
    %p218 = por %p216, %p217
    %p220 = scmp.ne.s32.totalorder %s205, %s219
    %p221 = scmp.eq.s32.totalorder %s20, 0
    %p222 = por %p220, %p221
    %s224 = sadd.s32 %s223, 1
    %p227 = scmp.eq.s32.totalorder %s14, 1
    %p228 = scmp.ne.s32.totalorder %s223, %s225
    %p229 = scmp.eq.s32.totalorder %s14, 0
    %p230 = por %p228, %p229
    %p231 = scmp.ne.s32.totalorder %s223, %s225
    %p232 = scmp.eq.s32.totalorder %s19, 1
    %p233 = por %p231, %p232
    %p234 = scmp.ne.s32.totalorder %s225, %s226
    %p235 = scmp.eq.s32.totalorder %s19, 0
    %p236 = por %p234, %p235
    %p237 = scmp.ne.s32.totalorder %s225, %s226
    %p238 = scmp.eq.s32.totalorder %s20, 1
    %p239 = por %p237, %p238
    %p241 = scmp.ne.s32.totalorder %s226, %s240
    %p242 = scmp.eq.s32.totalorder %s20, 0
    %p243 = por %p241, %p242
    %s244 = ssub.s32 %s21, %s33
    %s245 = ssub.s32 %s22, %s29
    %s246 = sor.u32 %s244, %s245
    %p247 = scmp.eq.s32.totalorder %s246, 0
    %s249 = sadd.s32 %s248, 1
    %s250 = scalar_select %p247, %s248, %s249
    %p253 = pneg %p247
    %p254 = scmp.eq.s32.totalorder %s14, 1
    %p255 = por %p253, %p254
    %p256 = scmp.ne.s32.totalorder %s248, %s251
    %p257 = scmp.eq.s32.totalorder %s14, 0
    %p258 = por %p256, %p257
    %p259 = scmp.ne.s32.totalorder %s248, %s251
    %p260 = scmp.eq.s32.totalorder %s19, 1
    %p261 = por %p259, %p260
    %p262 = scmp.ne.s32.totalorder %s251, %s252
    %p263 = scmp.eq.s32.totalorder %s19, 0
    %p264 = por %p262, %p263
    %p265 = scmp.ne.s32.totalorder %s251, %s252
    %p266 = scmp.eq.s32.totalorder %s20, 1
    %p267 = por %p265, %p266
    %p269 = scmp.ne.s32.totalorder %s252, %s268
    %p270 = scmp.eq.s32.totalorder %s20, 0
    %p271 = por %p269, %p270
    %p272 = scmp.le.s32.totalorder 1, %s14
    %p273 = scmp.lt.s32.totalorder %s14, 3
    %p274 = pnand %p272, %p273
    %p275 = pneg %p274
    // Predicated region
    $region9: #{downsample_forward.1} parent=5 // pred_check
      _
    $region10: #{downsample_forward.1} parent=5 // pred_check_branch
      %277 = sbr.rel (%p274) target = $region12
    $region11: #{downsample_forward.1} parent=5 // pred_region
      %s278 = ssub.s32 %s14, 1
      // Predicated region
      $region13: #{downsample_forward.1} parent=11 // pred_check
        %p279 = pneg %p215
      $region14: #{downsample_forward.1} parent=11 // pred_check_branch
        %281 = sbr.rel (%p279) target = $region16
      $region15: #{downsample_forward.1} parent=11 // pred_region
        _
      $region16: #{downsample_forward.1} parent=11 // pred_fallthru
        _
      // Predicated region
      $region17: #{downsample_forward.1} parent=11 // pred_check
        %p282 = pneg %p236
      $region18: #{downsample_forward.1} parent=11 // pred_check_branch
        %284 = sbr.rel (%p282) target = $region20
      $region19: #{downsample_forward.1} parent=11 // pred_region
        _
      $region20: #{downsample_forward.1} parent=11 // pred_fallthru
        _
    $region12: #{downsample_forward.1} parent=5 // pred_fallthru
      _
    %p285 = scmp.lt.s32.totalorder %s14, 2
    // Predicated region
    $region21: #{downsample_forward.1} parent=5 // pred_check
      %p286 = pneg %p285
    $region22: #{downsample_forward.1} parent=5 // pred_check_branch
      %288 = sbr.rel (%p286) target = $region24
    $region23: #{downsample_forward.1} parent=5 // pred_region
      // Predicated region
      $region25: #{downsample_forward.1} parent=23 // pred_check
        %p289 = pneg %p48
      $region26: #{downsample_forward.1} parent=23 // pred_check_branch
        %291 = sbr.rel (%p289) target = $region28
      $region27: #{downsample_forward.1} parent=23 // pred_region
        %s292 = smul.u32 8, %s22
        %p293 = scmp.lt.s32.totalorder %s21, 1
        %s294 = scalar_select %p293, %s21, 1
        %p295 = scmp.lt.s32.totalorder %s292, 7
        %s296 = scalar_select %p295, %s292, 7
        %s297 = smul.addr %s296, 2
        %s298 = smul.addr %s294, 16
        %s299 = sadd.s32 %s297, %s298
        %s300 = smul.addr %s299, 4
        %s301 = scalar_lea.vmem %s0, %s300
        %s302 = smul.u32 8, %s22
      $region28: #{downsample_forward.1} parent=23 // pred_fallthru
        _
      // Predicated region
      $region29: #{downsample_forward.1} parent=23 // pred_check
        %p303 = pneg %p76
      $region30: #{downsample_forward.1} parent=23 // pred_check_branch
        %305 = sbr.rel (%p303) target = $region32
      $region31: #{downsample_forward.1} parent=23 // pred_region
        %s306 = smul.u32 8, %s22
        %p307 = scmp.lt.s32.totalorder %s21, 1
        %s308 = scalar_select %p307, %s21, 1
        %p309 = scmp.lt.s32.totalorder %s306, 7
        %s310 = scalar_select %p309, %s306, 7
        %s311 = smul.addr %s308, 8
        %s312 = sadd.s32 %s310, %s311
        %s313 = smul.addr %s312, 4
        %s314 = scalar_lea.vmem %s1, %s313
        %s315 = smul.u32 8, %s22
      $region32: #{downsample_forward.1} parent=23 // pred_fallthru
        _
      // Predicated region
      $region33: #{downsample_forward.1} parent=23 // pred_check
        %p316 = pneg %p104
      $region34: #{downsample_forward.1} parent=23 // pred_check_branch
        %318 = sbr.rel (%p316) target = $region36
      $region35: #{downsample_forward.1} parent=23 // pred_region
        %s319 = smul.u32 8, %s22
        %p320 = scmp.lt.s32.totalorder %s21, 1
        %s321 = scalar_select %p320, %s21, 1
        %p322 = scmp.lt.s32.totalorder %s319, 7
        %s323 = scalar_select %p322, %s319, 7
        %s324 = smul.addr %s323, 2
        %s325 = smul.addr %s321, 16
        %s326 = sadd.s32 %s324, %s325
        %s327 = smul.addr %s326, 4
        %s328 = scalar_lea.vmem %s2, %s327
        %s329 = smul.u32 8, %s22
      $region36: #{downsample_forward.1} parent=23 // pred_fallthru
        _
      // Predicated region
      $region37: #{downsample_forward.1} parent=23 // pred_check
        %p330 = pneg %p132
      $region38: #{downsample_forward.1} parent=23 // pred_check_branch
        %332 = sbr.rel (%p330) target = $region40
      $region39: #{downsample_forward.1} parent=23 // pred_region
        %s333 = smul.u32 8, %s22
        %p334 = scmp.lt.s32.totalorder %s21, 1
        %s335 = scalar_select %p334, %s21, 1
        %p336 = scmp.lt.s32.totalorder %s333, 7
        %s337 = scalar_select %p336, %s333, 7
        %s338 = smul.addr %s335, 8
        %s339 = sadd.s32 %s337, %s338
        %s340 = smul.addr %s339, 4
        %s341 = scalar_lea.vmem %s3, %s340
        %s342 = smul.u32 8, %s22
      $region40: #{downsample_forward.1} parent=23 // pred_fallthru
        _
      // Predicated region
      $region41: #{downsample_forward.1} parent=23 // pred_check
        %p343 = pneg %p160
      $region42: #{downsample_forward.1} parent=23 // pred_check_branch
        %345 = sbr.rel (%p343) target = $region44
      $region43: #{downsample_forward.1} parent=23 // pred_region
        %s346 = smul.u32 8, %s22
        %p347 = scmp.lt.s32.totalorder %s21, 1
        %s348 = scalar_select %p347, %s21, 1
        %p349 = scmp.lt.s32.totalorder %s346, 7
        %s350 = scalar_select %p349, %s346, 7
        %s351 = smul.addr %s350, 2
        %s352 = smul.addr %s348, 16
        %s353 = sadd.s32 %s351, %s352
        %s354 = smul.addr %s353, 4
        %s355 = scalar_lea.vmem %s4, %s354
        %s356 = smul.u32 8, %s22
      $region44: #{downsample_forward.1} parent=23 // pred_fallthru
        _
      // Predicated region
      $region45: #{downsample_forward.1} parent=23 // pred_check
        %p357 = pneg %p188
      $region46: #{downsample_forward.1} parent=23 // pred_check_branch
        %359 = sbr.rel (%p357) target = $region48
      $region47: #{downsample_forward.1} parent=23 // pred_region
        %s360 = smul.u32 8, %s22
        %p361 = scmp.lt.s32.totalorder %s21, 1
        %s362 = scalar_select %p361, %s21, 1
        %p363 = scmp.lt.s32.totalorder %s360, 7
        %s364 = scalar_select %p363, %s360, 7
        %s365 = smul.addr %s362, 8
        %s366 = sadd.s32 %s364, %s365
        %s367 = smul.addr %s366, 4
        %s368 = scalar_lea.vmem %s5, %s367
        %s369 = smul.u32 8, %s22
      $region48: #{downsample_forward.1} parent=23 // pred_fallthru
        _
    $region24: #{downsample_forward.1} parent=5 // pred_fallthru
      _
    %p370 = scmp.le.s32.totalorder 1, %s14
    %p371 = scmp.lt.s32.totalorder %s14, 3
    %p372 = pnand %p370, %p371
    %p373 = pneg %p372
    // Predicated region
    $region49: #{downsample_forward.1} parent=5 // pred_check
      _
    $region50: #{downsample_forward.1} parent=5 // pred_check_branch
      %375 = sbr.rel (%p372) target = $region52
    $region51: #{downsample_forward.1} parent=5 // pred_region
      %s376 = ssub.s32 %s14, 1
      %s377 = smul.u32 8, %s24
      %p378 = scmp.lt.s32.totalorder %s23, 1
      %s379 = scalar_select %p378, %s23, 1
      %p380 = scmp.lt.s32.totalorder %s377, 7
      %s381 = scalar_select %p380, %s377, 7
      %s382 = smul.addr %s381, 2
      %s383 = smul.addr %s379, 16
      %s384 = sadd.s32 %s382, %s383
      %s385 = smul.addr %s384, 4
      %s386 = scalar_lea.vmem %s0, %s385
      %p387 = pneg %p54
      %p388 = pneg %p51
      %s389 = smul.u32 8, %s24
      %p390 = scmp.lt.s32.totalorder %s23, 1
      %s391 = scalar_select %p390, %s23, 1
      %p392 = scmp.lt.s32.totalorder %s389, 7
      %s393 = scalar_select %p392, %s389, 7
      %s394 = smul.addr %s391, 8
      %s395 = sadd.s32 %s393, %s394
      %s396 = smul.addr %s395, 4
      %s397 = scalar_lea.vmem %s1, %s396
      %p398 = pneg %p82
      %p399 = pneg %p79
      %s400 = smul.u32 8, %s24
      %p401 = scmp.lt.s32.totalorder %s23, 1
      %s402 = scalar_select %p401, %s23, 1
      %p403 = scmp.lt.s32.totalorder %s400, 7
      %s404 = scalar_select %p403, %s400, 7
      %s405 = smul.addr %s404, 2
      %s406 = smul.addr %s402, 16
      %s407 = sadd.s32 %s405, %s406
      %s408 = smul.addr %s407, 4
      %s409 = scalar_lea.vmem %s2, %s408
      %p410 = pneg %p110
      %p411 = pneg %p107
      %s412 = smul.u32 8, %s24
      %p413 = scmp.lt.s32.totalorder %s23, 1
      %s414 = scalar_select %p413, %s23, 1
      %p415 = scmp.lt.s32.totalorder %s412, 7
      %s416 = scalar_select %p415, %s412, 7
      %s417 = smul.addr %s414, 8
      %s418 = sadd.s32 %s416, %s417
      %s419 = smul.addr %s418, 4
      %s420 = scalar_lea.vmem %s3, %s419
      %p421 = pneg %p138
      %p422 = pneg %p135
      %s423 = smul.u32 8, %s24
      %p424 = scmp.lt.s32.totalorder %s23, 1
      %s425 = scalar_select %p424, %s23, 1
      %p426 = scmp.lt.s32.totalorder %s423, 7
      %s427 = scalar_select %p426, %s423, 7
      %s428 = smul.addr %s427, 2
      %s429 = smul.addr %s425, 16
      %s430 = sadd.s32 %s428, %s429
      %s431 = smul.addr %s430, 4
      %s432 = scalar_lea.vmem %s4, %s431
      %p433 = pneg %p166
      %p434 = pneg %p163
      %s435 = smul.u32 8, %s24
      %p436 = scmp.lt.s32.totalorder %s23, 1
      %s437 = scalar_select %p436, %s23, 1
      %p438 = scmp.lt.s32.totalorder %s435, 7
      %s439 = scalar_select %p438, %s435, 7
      %s440 = smul.addr %s437, 8
      %s441 = sadd.s32 %s439, %s440
      %s442 = smul.addr %s441, 4
      %s443 = scalar_lea.vmem %s5, %s442
      %p444 = pneg %p194
      %p445 = pneg %p191
      %p446 = pneg %p215
      %p447 = pneg %p212
      %p448 = pneg %p236
      %p449 = pneg %p233
      %p450 = pneg %p264
      %p451 = pneg %p261
      %s452 = smul.u32 8, %s24
      %p453 = scmp.lt.s32.totalorder %s23, 1
      %s454 = scalar_select %p453, %s23, 1
      %p455 = scmp.lt.s32.totalorder %s452, 7
      %s456 = scalar_select %p455, %s452, 7
      %s457 = smul.addr %s454, 8
      %s458 = sadd.s32 %s456, %s457
      %s459 = smul.addr %s458, 8
      %s460 = scalar_lea.vmem %s8, %s459
      %s461 = smul.u32 8, %s24
      %p462 = scmp.lt.s32.totalorder %s23, 1
      %s463 = scalar_select %p462, %s23, 1
      %p464 = scmp.lt.s32.totalorder %s461, 7
      %s465 = scalar_select %p464, %s461, 7
      %s466 = smul.addr %s465, 2
      %s467 = smul.addr %s463, 16
      %s468 = sadd.s32 %s466, %s467
      %s469 = smul.addr %s468, 4
      %s470 = scalar_lea.vmem %s0, %s469
      %s471 = smul.u32 8, %s24
      %s472 = smul.u32 8, %s24
      %p473 = scmp.lt.s32.totalorder %s23, 1
      %s474 = scalar_select %p473, %s23, 1
      %p475 = scmp.lt.s32.totalorder %s472, 7
      %s476 = scalar_select %p475, %s472, 7
      %s477 = smul.addr %s474, 8
      %s478 = sadd.s32 %s476, %s477
      %s479 = smul.addr %s478, 4
      %s480 = scalar_lea.vmem %s1, %s479
      %s481 = smul.u32 8, %s24
      %s482 = smul.u32 8, %s24
      %p483 = scmp.lt.s32.totalorder %s23, 1
      %s484 = scalar_select %p483, %s23, 1
      %p485 = scmp.lt.s32.totalorder %s482, 7
      %s486 = scalar_select %p485, %s482, 7
      %s487 = smul.addr %s486, 2
      %s488 = smul.addr %s484, 16
      %s489 = sadd.s32 %s487, %s488
      %s490 = smul.addr %s489, 4
      %s491 = scalar_lea.vmem %s2, %s490
      %s492 = smul.u32 8, %s24
      %s493 = smul.u32 8, %s24
      %p494 = scmp.lt.s32.totalorder %s23, 1
      %s495 = scalar_select %p494, %s23, 1
      %p496 = scmp.lt.s32.totalorder %s493, 7
      %s497 = scalar_select %p496, %s493, 7
      %s498 = smul.addr %s495, 8
      %s499 = sadd.s32 %s497, %s498
      %s500 = smul.addr %s499, 4
      %s501 = scalar_lea.vmem %s3, %s500
      %s502 = smul.u32 8, %s24
      %s503 = smul.u32 8, %s24
      %p504 = scmp.lt.s32.totalorder %s23, 1
      %s505 = scalar_select %p504, %s23, 1
      %p506 = scmp.lt.s32.totalorder %s503, 7
      %s507 = scalar_select %p506, %s503, 7
      %s508 = smul.addr %s507, 2
      %s509 = smul.addr %s505, 16
      %s510 = sadd.s32 %s508, %s509
      %s511 = smul.addr %s510, 4
      %s512 = scalar_lea.vmem %s4, %s511
      %s513 = smul.u32 8, %s24
      %s514 = smul.u32 8, %s24
      %p515 = scmp.lt.s32.totalorder %s23, 1
      %s516 = scalar_select %p515, %s23, 1
      %p517 = scmp.lt.s32.totalorder %s514, 7
      %s518 = scalar_select %p517, %s514, 7
      %s519 = smul.addr %s516, 8
      %s520 = sadd.s32 %s518, %s519
      %s521 = smul.addr %s520, 4
      %s522 = scalar_lea.vmem %s5, %s521
      %s523 = smul.u32 8, %s24
      %s524 = smul.u32 8, %s24
      %p525 = scmp.lt.s32.totalorder %s23, 1
      %s526 = scalar_select %p525, %s23, 1
      %p527 = scmp.lt.s32.totalorder %s524, 7
      %s528 = scalar_select %p527, %s524, 7
      %s529 = smul.addr %s526, 8
      %s530 = sadd.s32 %s528, %s529
      %s531 = smul.addr %s530, 8
      %s532 = scalar_lea.vmem %s8, %s531
      %s533 = smul.u32 8, %s24
      %v535 = vld [vmem:[%s470] sm:$0xf]
      %v536 = vld [vmem:[%s470 + $0x4] sm:$0x1]
      %v537 = vld [vmem:[%s470 + $0x8] sm:$0xf]
      %v538 = vld [vmem:[%s470 + $0xc] sm:$0x1]
      %v539 = vld [vmem:[%s470 + $0x10] sm:$0xf]
      %v540 = vld [vmem:[%s470 + $0x14] sm:$0x1]
      %v541 = vld [vmem:[%s470 + $0x18] sm:$0xf]
      %v542 = vld [vmem:[%s470 + $0x1c] sm:$0x1]
      %v543 = vld [vmem:[%s470 + $0x20] sm:$0xf]
      %v544 = vld [vmem:[%s470 + $0x24] sm:$0x1]
      %v545 = vld [vmem:[%s470 + $0x28] sm:$0xf]
      %v546 = vld [vmem:[%s470 + $0x2c] sm:$0x1]
      %v547 = vld [vmem:[%s470 + $0x30] sm:$0xf]
      %v548 = vld [vmem:[%s470 + $0x34] sm:$0x1]
      %v549 = vld [vmem:[%s470 + $0x38] sm:$0xf]
      %v550 = vld [vmem:[%s470 + $0x3c] sm:$0x1]
      %v551 = vld [vmem:[%s480] sm:$0xf]
      %v552 = vld [vmem:[%s480 + $0x4] sm:$0xf]
      %v553 = vld [vmem:[%s480 + $0x8] sm:$0xf]
      %v554 = vld [vmem:[%s480 + $0xc] sm:$0xf]
      %v555 = vld [vmem:[%s480 + $0x10] sm:$0xf]
      %v556 = vld [vmem:[%s480 + $0x14] sm:$0xf]
      %v557 = vld [vmem:[%s480 + $0x18] sm:$0xf]
      %v558 = vld [vmem:[%s480 + $0x1c] sm:$0xf]
      %v559 = vld [vmem:[%s6] sm:$0x3]
      %s560 = scalar_lea.vmem %s6, 2
      %v561 = vld [vmem:[%s560] sm:$0x3]
      %v570 = vunpack.c.l.b16 %v551
      %v571 = vunpack.c.l.b16 %v552
      %v572 = vunpack.c.l.b16 %v553
      %v573 = vunpack.c.l.b16 %v554
      %v574 = vunpack.c.l.b16 %v555
      %v575 = vunpack.c.l.b16 %v556
      %v576 = vunpack.c.l.b16 %v557
      %v577 = vunpack.c.l.b16 %v558
      %v578 = vpack.c.b16 %v571, %v570
      %v579 = vpack.c.b16 %v573, %v572
      %v580 = vpack.c.b16 %v575, %v574
      %v581 = vpack.c.b16 %v577, %v576
      %vm582 = vcmask 31744
      %v584 = vsel %vm582, %v578, 0
      %v587 = vsel %vm582, %v579, 0
      %v590 = vsel %vm582, %v580, 0
      %v593 = vsel %vm582, %v581, 0
      %vm595 = vcmask 1041408
      %v597 = vsel %vm595, %v561, 0
      %599 = vmatpush.bf16.msra.mxu0 0
      %600 = vmatpush.bf16.msra.mxu0 0
      %601 = vmatpush.bf16.msra.mxu0 0
      %602 = vmatpush.bf16.msra.mxu0 0
      %603 = vmatpush.bf16.msra.mxu0 0
      %604 = vmatpush.bf16.msra.mxu0 0
      %605 = vmatpush.bf16.msra.mxu0 0
      %606 = vmatpush.bf16.msra.mxu0 %v597
      %607 = vmatmul.bf16.gmra.mxu0 %v584
      %v608 = vpop.f32.mrf.mxu0
      %v609 = vadd.f32 0.0, %v608
      %v610 = vpop.f32.mrf.mxu0
      %v611 = vadd.f32 0.0, %v610
      %612 = vmatmul.bf16.gmra.mxu0 %v587
      %v613 = vpop.f32.mrf.mxu0
      %v614 = vadd.f32 0.0, %v613
      %v615 = vpop.f32.mrf.mxu0
      %v616 = vadd.f32 0.0, %v615
      %617 = vmatmul.bf16.gmra.mxu0 %v590
      %v618 = vpop.f32.mrf.mxu0
      %v619 = vadd.f32 0.0, %v618
      %v620 = vpop.f32.mrf.mxu0
      %v621 = vadd.f32 0.0, %v620
      %622 = vmatmul.bf16.gmra.mxu0 %v593
      %v623 = vpop.f32.mrf.mxu0
      %v624 = vadd.f32 0.0, %v623
      %v625 = vpop.f32.mrf.mxu0
      %v626 = vadd.f32 0.0, %v625
      %627 = vdwg.mxu0
      %v636 = vunpack.c.l.b16 %v535
      %v637 = vunpack.c.l.b16 %v537
      %v638 = vunpack.c.l.b16 %v539
      %v639 = vunpack.c.l.b16 %v541
      %v640 = vunpack.c.l.b16 %v543
      %v641 = vunpack.c.l.b16 %v545
      %v642 = vunpack.c.l.b16 %v547
      %v643 = vunpack.c.l.b16 %v549
      %v644 = vpack.c.b16 %v637, %v636
      %v645 = vpack.c.b16 %v639, %v638
      %v646 = vpack.c.b16 %v641, %v640
      %v647 = vpack.c.b16 %v643, %v642
      %v649 = vsel %vm582, %v644, 0
      %v652 = vsel %vm582, %v645, 0
      %v655 = vsel %vm582, %v646, 0
      %v658 = vsel %vm582, %v647, 0
      %v661 = vsel %vm595, %v559, 0
      %663 = vmatpush.bf16.msra.mxu0 0
      %664 = vmatpush.bf16.msra.mxu0 0
      %665 = vmatpush.bf16.msra.mxu0 0
      %666 = vmatpush.bf16.msra.mxu0 0
      %667 = vmatpush.bf16.msra.mxu0 0
      %668 = vmatpush.bf16.msra.mxu0 0
      %669 = vmatpush.bf16.msra.mxu0 0
      %670 = vmatpush.bf16.msra.mxu0 %v661
      %671 = vmatmul.bf16.gmra.mxu0 %v649
      %v672 = vpop.f32.mrf.mxu0
      %v673 = vadd.f32 %v609, %v672
      %v674 = vpop.f32.mrf.mxu0
      %v675 = vadd.f32 %v611, %v674
      %676 = vmatmul.bf16.gmra.mxu0 %v652
      %v677 = vpop.f32.mrf.mxu0
      %v678 = vadd.f32 %v614, %v677
      %v679 = vpop.f32.mrf.mxu0
      %v680 = vadd.f32 %v616, %v679
      %681 = vmatmul.bf16.gmra.mxu0 %v655
      %v682 = vpop.f32.mrf.mxu0
      %v683 = vadd.f32 %v619, %v682
      %v684 = vpop.f32.mrf.mxu0
      %v685 = vadd.f32 %v621, %v684
      %686 = vmatmul.bf16.gmra.mxu0 %v658
      %v687 = vpop.f32.mrf.mxu0
      %v688 = vadd.f32 %v624, %v687
      %v689 = vpop.f32.mrf.mxu0
      %v690 = vadd.f32 %v626, %v689
      %691 = vdwg.mxu0
      %vm692 = vsmask.f32 3328
      %vm693 = vsmask.f32 7440
      %vm694 = vmor %vm692, %vm693
      %v696 = vshrl.u32 %v535, 16
      %v698 = vrot.slane %v696, 4
      %v699 = vshll.u32 %v535, 16
      %v701 = vrot.slane %v699, 5
      %v702 = vor.u32 %v698, %v701
      %v703 = vrot.slane %v702, 4
      %v705 = vshll.u32 %v536, 16
      %v707 = vrot.slane %v705, 5
      %v708 = vsel %vm694, %v703, %v707
      %v710 = vshrl.u32 %v537, 16
      %v712 = vrot.slane %v710, 4
      %v713 = vshll.u32 %v537, 16
      %v715 = vrot.slane %v713, 5
      %v716 = vor.u32 %v712, %v715
      %v717 = vrot.slane %v716, 4
      %v719 = vshll.u32 %v538, 16
      %v721 = vrot.slane %v719, 5
      %v722 = vsel %vm694, %v717, %v721
      %v724 = vshrl.u32 %v539, 16
      %v726 = vrot.slane %v724, 4
      %v727 = vshll.u32 %v539, 16
      %v729 = vrot.slane %v727, 5
      %v730 = vor.u32 %v726, %v729
      %v731 = vrot.slane %v730, 4
      %v733 = vshll.u32 %v540, 16
      %v735 = vrot.slane %v733, 5
      %v736 = vsel %vm694, %v731, %v735
      %v738 = vshrl.u32 %v541, 16
      %v740 = vrot.slane %v738, 4
      %v741 = vshll.u32 %v541, 16
      %v743 = vrot.slane %v741, 5
      %v744 = vor.u32 %v740, %v743
      %v745 = vrot.slane %v744, 4
      %v747 = vshll.u32 %v542, 16
      %v749 = vrot.slane %v747, 5
      %v750 = vsel %vm694, %v745, %v749
      %v752 = vshrl.u32 %v543, 16
      %v754 = vrot.slane %v752, 4
      %v755 = vshll.u32 %v543, 16
      %v757 = vrot.slane %v755, 5
      %v758 = vor.u32 %v754, %v757
      %v759 = vrot.slane %v758, 4
      %v761 = vshll.u32 %v544, 16
      %v763 = vrot.slane %v761, 5
      %v764 = vsel %vm694, %v759, %v763
      %v766 = vshrl.u32 %v545, 16
      %v768 = vrot.slane %v766, 4
      %v769 = vshll.u32 %v545, 16
      %v771 = vrot.slane %v769, 5
      %v772 = vor.u32 %v768, %v771
      %v773 = vrot.slane %v772, 4
      %v775 = vshll.u32 %v546, 16
      %v777 = vrot.slane %v775, 5
      %v778 = vsel %vm694, %v773, %v777
      %v780 = vshrl.u32 %v547, 16
      %v782 = vrot.slane %v780, 4
      %v783 = vshll.u32 %v547, 16
      %v785 = vrot.slane %v783, 5
      %v786 = vor.u32 %v782, %v785
      %v787 = vrot.slane %v786, 4
      %v789 = vshll.u32 %v548, 16
      %v791 = vrot.slane %v789, 5
      %v792 = vsel %vm694, %v787, %v791
      %v794 = vshrl.u32 %v549, 16
      %v796 = vrot.slane %v794, 4
      %v797 = vshll.u32 %v549, 16
      %v799 = vrot.slane %v797, 5
      %v800 = vor.u32 %v796, %v799
      %v801 = vrot.slane %v800, 4
      %v803 = vshll.u32 %v550, 16
      %v805 = vrot.slane %v803, 5
      %v806 = vsel %vm694, %v801, %v805
      %s807 = scalar_lea.vmem %s6, 4
      %v808 = vld [vmem:[%s807] sm:$0x3]
      %v809 = vunpack.c.l.b16 %v708
      %v810 = vunpack.c.l.b16 %v722
      %v811 = vunpack.c.l.b16 %v736
      %v812 = vunpack.c.l.b16 %v750
      %v813 = vunpack.c.l.b16 %v764
      %v814 = vunpack.c.l.b16 %v778
      %v815 = vunpack.c.l.b16 %v792
      %v816 = vunpack.c.l.b16 %v806
      %v817 = vpack.c.b16 %v810, %v809
      %v818 = vpack.c.b16 %v812, %v811
      %v819 = vpack.c.b16 %v814, %v813
      %v820 = vpack.c.b16 %v816, %v815
      %v822 = vsel %vm582, %v817, 0
      %v825 = vsel %vm582, %v818, 0
      %v828 = vsel %vm582, %v819, 0
      %v831 = vsel %vm582, %v820, 0
      %v834 = vsel %vm595, %v808, 0
      %836 = vmatpush.bf16.msra.mxu0 0
      %837 = vmatpush.bf16.msra.mxu0 0
      %838 = vmatpush.bf16.msra.mxu0 0
      %839 = vmatpush.bf16.msra.mxu0 0
      %840 = vmatpush.bf16.msra.mxu0 0
      %841 = vmatpush.bf16.msra.mxu0 0
      %842 = vmatpush.bf16.msra.mxu0 0
      %843 = vmatpush.bf16.msra.mxu0 %v834
      %844 = vmatmul.bf16.gmra.mxu0 %v822
      %v845 = vpop.f32.mrf.mxu0
      %v846 = vadd.f32 0.0, %v845
      %v847 = vpop.f32.mrf.mxu0
      %v848 = vadd.f32 0.0, %v847
      %849 = vmatmul.bf16.gmra.mxu0 %v825
      %v850 = vpop.f32.mrf.mxu0
      %v851 = vadd.f32 0.0, %v850
      %v852 = vpop.f32.mrf.mxu0
      %v853 = vadd.f32 0.0, %v852
      %854 = vmatmul.bf16.gmra.mxu0 %v828
      %v855 = vpop.f32.mrf.mxu0
      %v856 = vadd.f32 0.0, %v855
      %v857 = vpop.f32.mrf.mxu0
      %v858 = vadd.f32 0.0, %v857
      %859 = vmatmul.bf16.gmra.mxu0 %v831
      %v860 = vpop.f32.mrf.mxu0
      %v861 = vadd.f32 0.0, %v860
      %v862 = vpop.f32.mrf.mxu0
      %v863 = vadd.f32 0.0, %v862
      %864 = vdwg.mxu0
      %v865 = vadd.f32 %v673, %v846
      %v866 = vadd.f32 %v675, %v848
      %v867 = vadd.f32 %v678, %v851
      %v868 = vadd.f32 %v680, %v853
      %v869 = vadd.f32 %v683, %v856
      %v870 = vadd.f32 %v685, %v858
      %v871 = vadd.f32 %v688, %v861
      %v872 = vadd.f32 %v690, %v863
      %v873 = vld [vmem:[%s491] sm:$0xf]
      %v874 = vld [vmem:[%s491 + $0x4] sm:$0x1]
      %v875 = vld [vmem:[%s491 + $0x8] sm:$0xf]
      %v876 = vld [vmem:[%s491 + $0xc] sm:$0x1]
      %v877 = vld [vmem:[%s491 + $0x10] sm:$0xf]
      %v878 = vld [vmem:[%s491 + $0x14] sm:$0x1]
      %v879 = vld [vmem:[%s491 + $0x18] sm:$0xf]
      %v880 = vld [vmem:[%s491 + $0x1c] sm:$0x1]
      %v881 = vld [vmem:[%s491 + $0x20] sm:$0xf]
      %v882 = vld [vmem:[%s491 + $0x24] sm:$0x1]
      %v883 = vld [vmem:[%s491 + $0x28] sm:$0xf]
      %v884 = vld [vmem:[%s491 + $0x2c] sm:$0x1]
      %v885 = vld [vmem:[%s491 + $0x30] sm:$0xf]
      %v886 = vld [vmem:[%s491 + $0x34] sm:$0x1]
      %v887 = vld [vmem:[%s491 + $0x38] sm:$0xf]
      %v888 = vld [vmem:[%s491 + $0x3c] sm:$0x1]
      %v889 = vld [vmem:[%s501] sm:$0xf]
      %v890 = vld [vmem:[%s501 + $0x4] sm:$0xf]
      %v891 = vld [vmem:[%s501 + $0x8] sm:$0xf]
      %v892 = vld [vmem:[%s501 + $0xc] sm:$0xf]
      %v893 = vld [vmem:[%s501 + $0x10] sm:$0xf]
      %v894 = vld [vmem:[%s501 + $0x14] sm:$0xf]
      %v895 = vld [vmem:[%s501 + $0x18] sm:$0xf]
      %v896 = vld [vmem:[%s501 + $0x1c] sm:$0xf]
      %s897 = scalar_lea.vmem %s6, 6
      %v898 = vld [vmem:[%s897] sm:$0x3]
      %v907 = vunpack.c.l.b16 %v873
      %v908 = vunpack.c.l.b16 %v875
      %v909 = vunpack.c.l.b16 %v877
      %v910 = vunpack.c.l.b16 %v879
      %v911 = vunpack.c.l.b16 %v881
      %v912 = vunpack.c.l.b16 %v883
      %v913 = vunpack.c.l.b16 %v885
      %v914 = vunpack.c.l.b16 %v887
      %v915 = vpack.c.b16 %v908, %v907
      %v916 = vpack.c.b16 %v910, %v909
      %v917 = vpack.c.b16 %v912, %v911
      %v918 = vpack.c.b16 %v914, %v913
      %v920 = vsel %vm582, %v915, 0
      %v923 = vsel %vm582, %v916, 0
      %v926 = vsel %vm582, %v917, 0
      %v929 = vsel %vm582, %v918, 0
      %v932 = vsel %vm595, %v898, 0
      %934 = vmatpush.bf16.msra.mxu0 0
      %935 = vmatpush.bf16.msra.mxu0 0
      %936 = vmatpush.bf16.msra.mxu0 0
      %937 = vmatpush.bf16.msra.mxu0 0
      %938 = vmatpush.bf16.msra.mxu0 0
      %939 = vmatpush.bf16.msra.mxu0 0
      %940 = vmatpush.bf16.msra.mxu0 0
      %941 = vmatpush.bf16.msra.mxu0 %v932
      %942 = vmatmul.bf16.gmra.mxu0 %v920
      %v943 = vpop.f32.mrf.mxu0
      %v944 = vadd.f32 0.0, %v943
      %v945 = vpop.f32.mrf.mxu0
      %v946 = vadd.f32 0.0, %v945
      %947 = vmatmul.bf16.gmra.mxu0 %v923
      %v948 = vpop.f32.mrf.mxu0
      %v949 = vadd.f32 0.0, %v948
      %v950 = vpop.f32.mrf.mxu0
      %v951 = vadd.f32 0.0, %v950
      %952 = vmatmul.bf16.gmra.mxu0 %v926
      %v953 = vpop.f32.mrf.mxu0
      %v954 = vadd.f32 0.0, %v953
      %v955 = vpop.f32.mrf.mxu0
      %v956 = vadd.f32 0.0, %v955
      %957 = vmatmul.bf16.gmra.mxu0 %v929
      %v958 = vpop.f32.mrf.mxu0
      %v959 = vadd.f32 0.0, %v958
      %v960 = vpop.f32.mrf.mxu0
      %v961 = vadd.f32 0.0, %v960
      %962 = vdwg.mxu0
      %v963 = vadd.f32 %v865, %v944
      %v964 = vadd.f32 %v866, %v946
      %v965 = vadd.f32 %v867, %v949
      %v966 = vadd.f32 %v868, %v951
      %v967 = vadd.f32 %v869, %v954
      %v968 = vadd.f32 %v870, %v956
      %v969 = vadd.f32 %v871, %v959
      %v970 = vadd.f32 %v872, %v961
      %s971 = scalar_lea.vmem %s6, 8
      %v972 = vld [vmem:[%s971] sm:$0x3]
      %v981 = vunpack.c.l.b16 %v889
      %v982 = vunpack.c.l.b16 %v890
      %v983 = vunpack.c.l.b16 %v891
      %v984 = vunpack.c.l.b16 %v892
      %v985 = vunpack.c.l.b16 %v893
      %v986 = vunpack.c.l.b16 %v894
      %v987 = vunpack.c.l.b16 %v895
      %v988 = vunpack.c.l.b16 %v896
      %v989 = vpack.c.b16 %v982, %v981
      %v990 = vpack.c.b16 %v984, %v983
      %v991 = vpack.c.b16 %v986, %v985
      %v992 = vpack.c.b16 %v988, %v987
      %v994 = vsel %vm582, %v989, 0
      %v997 = vsel %vm582, %v990, 0
      %v1000 = vsel %vm582, %v991, 0
      %v1003 = vsel %vm582, %v992, 0
      %v1006 = vsel %vm595, %v972, 0
      %1008 = vmatpush.bf16.msra.mxu0 0
      %1009 = vmatpush.bf16.msra.mxu0 0
      %1010 = vmatpush.bf16.msra.mxu0 0
      %1011 = vmatpush.bf16.msra.mxu0 0
      %1012 = vmatpush.bf16.msra.mxu0 0
      %1013 = vmatpush.bf16.msra.mxu0 0
      %1014 = vmatpush.bf16.msra.mxu0 0
      %1015 = vmatpush.bf16.msra.mxu0 %v1006
      %1016 = vmatmul.bf16.gmra.mxu0 %v994
      %v1017 = vpop.f32.mrf.mxu0
      %v1018 = vadd.f32 0.0, %v1017
      %v1019 = vpop.f32.mrf.mxu0
      %v1020 = vadd.f32 0.0, %v1019
      %1021 = vmatmul.bf16.gmra.mxu0 %v997
      %v1022 = vpop.f32.mrf.mxu0
      %v1023 = vadd.f32 0.0, %v1022
      %v1024 = vpop.f32.mrf.mxu0
      %v1025 = vadd.f32 0.0, %v1024
      %1026 = vmatmul.bf16.gmra.mxu0 %v1000
      %v1027 = vpop.f32.mrf.mxu0
      %v1028 = vadd.f32 0.0, %v1027
      %v1029 = vpop.f32.mrf.mxu0
      %v1030 = vadd.f32 0.0, %v1029
      %1031 = vmatmul.bf16.gmra.mxu0 %v1003
      %v1032 = vpop.f32.mrf.mxu0
      %v1033 = vadd.f32 0.0, %v1032
      %v1034 = vpop.f32.mrf.mxu0
      %v1035 = vadd.f32 0.0, %v1034
      %1036 = vdwg.mxu0
      %v1037 = vadd.f32 %v963, %v1018
      %v1038 = vadd.f32 %v964, %v1020
      %v1039 = vadd.f32 %v965, %v1023
      %v1040 = vadd.f32 %v966, %v1025
      %v1041 = vadd.f32 %v967, %v1028
      %v1042 = vadd.f32 %v968, %v1030
      %v1043 = vadd.f32 %v969, %v1033
      %v1044 = vadd.f32 %v970, %v1035
      %v1046 = vshrl.u32 %v873, 16
      %v1048 = vrot.slane %v1046, 4
      %v1049 = vshll.u32 %v873, 16
      %v1051 = vrot.slane %v1049, 5
      %v1052 = vor.u32 %v1048, %v1051
      %v1053 = vrot.slane %v1052, 4
      %v1055 = vshll.u32 %v874, 16
      %v1057 = vrot.slane %v1055, 5
      %v1058 = vsel %vm694, %v1053, %v1057
      %v1060 = vshrl.u32 %v875, 16
      %v1062 = vrot.slane %v1060, 4
      %v1063 = vshll.u32 %v875, 16
      %v1065 = vrot.slane %v1063, 5
      %v1066 = vor.u32 %v1062, %v1065
      %v1067 = vrot.slane %v1066, 4
      %v1069 = vshll.u32 %v876, 16
      %v1071 = vrot.slane %v1069, 5
      %v1072 = vsel %vm694, %v1067, %v1071
      %v1074 = vshrl.u32 %v877, 16
      %v1076 = vrot.slane %v1074, 4
      %v1077 = vshll.u32 %v877, 16
      %v1079 = vrot.slane %v1077, 5
      %v1080 = vor.u32 %v1076, %v1079
      %v1081 = vrot.slane %v1080, 4
      %v1083 = vshll.u32 %v878, 16
      %v1085 = vrot.slane %v1083, 5
      %v1086 = vsel %vm694, %v1081, %v1085
      %v1088 = vshrl.u32 %v879, 16
      %v1090 = vrot.slane %v1088, 4
      %v1091 = vshll.u32 %v879, 16
      %v1093 = vrot.slane %v1091, 5
      %v1094 = vor.u32 %v1090, %v1093
      %v1095 = vrot.slane %v1094, 4
      %v1097 = vshll.u32 %v880, 16
      %v1099 = vrot.slane %v1097, 5
      %v1100 = vsel %vm694, %v1095, %v1099
      %v1102 = vshrl.u32 %v881, 16
      %v1104 = vrot.slane %v1102, 4
      %v1105 = vshll.u32 %v881, 16
      %v1107 = vrot.slane %v1105, 5
      %v1108 = vor.u32 %v1104, %v1107
      %v1109 = vrot.slane %v1108, 4
      %v1111 = vshll.u32 %v882, 16
      %v1113 = vrot.slane %v1111, 5
      %v1114 = vsel %vm694, %v1109, %v1113
      %v1116 = vshrl.u32 %v883, 16
      %v1118 = vrot.slane %v1116, 4
      %v1119 = vshll.u32 %v883, 16
      %v1121 = vrot.slane %v1119, 5
      %v1122 = vor.u32 %v1118, %v1121
      %v1123 = vrot.slane %v1122, 4
      %v1125 = vshll.u32 %v884, 16
      %v1127 = vrot.slane %v1125, 5
      %v1128 = vsel %vm694, %v1123, %v1127
      %v1130 = vshrl.u32 %v885, 16
      %v1132 = vrot.slane %v1130, 4
      %v1133 = vshll.u32 %v885, 16
      %v1135 = vrot.slane %v1133, 5
      %v1136 = vor.u32 %v1132, %v1135
      %v1137 = vrot.slane %v1136, 4
      %v1139 = vshll.u32 %v886, 16
      %v1141 = vrot.slane %v1139, 5
      %v1142 = vsel %vm694, %v1137, %v1141
      %v1144 = vshrl.u32 %v887, 16
      %v1146 = vrot.slane %v1144, 4
      %v1147 = vshll.u32 %v887, 16
      %v1149 = vrot.slane %v1147, 5
      %v1150 = vor.u32 %v1146, %v1149
      %v1151 = vrot.slane %v1150, 4
      %v1153 = vshll.u32 %v888, 16
      %v1155 = vrot.slane %v1153, 5
      %v1156 = vsel %vm694, %v1151, %v1155
      %s1157 = scalar_lea.vmem %s6, 10
      %v1158 = vld [vmem:[%s1157] sm:$0x3]
      %v1159 = vunpack.c.l.b16 %v1058
      %v1160 = vunpack.c.l.b16 %v1072
      %v1161 = vunpack.c.l.b16 %v1086
      %v1162 = vunpack.c.l.b16 %v1100
      %v1163 = vunpack.c.l.b16 %v1114
      %v1164 = vunpack.c.l.b16 %v1128
      %v1165 = vunpack.c.l.b16 %v1142
      %v1166 = vunpack.c.l.b16 %v1156
      %v1167 = vpack.c.b16 %v1160, %v1159
      %v1168 = vpack.c.b16 %v1162, %v1161
      %v1169 = vpack.c.b16 %v1164, %v1163
      %v1170 = vpack.c.b16 %v1166, %v1165
      %v1172 = vsel %vm582, %v1167, 0
      %v1175 = vsel %vm582, %v1168, 0
      %v1178 = vsel %vm582, %v1169, 0
      %v1181 = vsel %vm582, %v1170, 0
      %v1184 = vsel %vm595, %v1158, 0
      %1186 = vmatpush.bf16.msra.mxu0 0
      %1187 = vmatpush.bf16.msra.mxu0 0
      %1188 = vmatpush.bf16.msra.mxu0 0
      %1189 = vmatpush.bf16.msra.mxu0 0
      %1190 = vmatpush.bf16.msra.mxu0 0
      %1191 = vmatpush.bf16.msra.mxu0 0
      %1192 = vmatpush.bf16.msra.mxu0 0
      %1193 = vmatpush.bf16.msra.mxu0 %v1184
      %1194 = vmatmul.bf16.gmra.mxu0 %v1172
      %v1195 = vpop.f32.mrf.mxu0
      %v1196 = vadd.f32 0.0, %v1195
      %v1197 = vpop.f32.mrf.mxu0
      %v1198 = vadd.f32 0.0, %v1197
      %1199 = vmatmul.bf16.gmra.mxu0 %v1175
      %v1200 = vpop.f32.mrf.mxu0
      %v1201 = vadd.f32 0.0, %v1200
      %v1202 = vpop.f32.mrf.mxu0
      %v1203 = vadd.f32 0.0, %v1202
      %1204 = vmatmul.bf16.gmra.mxu0 %v1178
      %v1205 = vpop.f32.mrf.mxu0
      %v1206 = vadd.f32 0.0, %v1205
      %v1207 = vpop.f32.mrf.mxu0
      %v1208 = vadd.f32 0.0, %v1207
      %1209 = vmatmul.bf16.gmra.mxu0 %v1181
      %v1210 = vpop.f32.mrf.mxu0
      %v1211 = vadd.f32 0.0, %v1210
      %v1212 = vpop.f32.mrf.mxu0
      %v1213 = vadd.f32 0.0, %v1212
      %1214 = vdwg.mxu0
      %v1215 = vadd.f32 %v1037, %v1196
      %v1216 = vadd.f32 %v1038, %v1198
      %v1217 = vadd.f32 %v1039, %v1201
      %v1218 = vadd.f32 %v1040, %v1203
      %v1219 = vadd.f32 %v1041, %v1206
      %v1220 = vadd.f32 %v1042, %v1208
      %v1221 = vadd.f32 %v1043, %v1211
      %v1222 = vadd.f32 %v1044, %v1213
      %v1223 = vld [vmem:[%s512] sm:$0xf]
      %v1224 = vld [vmem:[%s512 + $0x4] sm:$0x1]
      %v1225 = vld [vmem:[%s512 + $0x8] sm:$0xf]
      %v1226 = vld [vmem:[%s512 + $0xc] sm:$0x1]
      %v1227 = vld [vmem:[%s512 + $0x10] sm:$0xf]
      %v1228 = vld [vmem:[%s512 + $0x14] sm:$0x1]
      %v1229 = vld [vmem:[%s512 + $0x18] sm:$0xf]
      %v1230 = vld [vmem:[%s512 + $0x1c] sm:$0x1]
      %v1231 = vld [vmem:[%s512 + $0x20] sm:$0xf]
      %v1232 = vld [vmem:[%s512 + $0x24] sm:$0x1]
      %v1233 = vld [vmem:[%s512 + $0x28] sm:$0xf]
      %v1234 = vld [vmem:[%s512 + $0x2c] sm:$0x1]
      %v1235 = vld [vmem:[%s512 + $0x30] sm:$0xf]
      %v1236 = vld [vmem:[%s512 + $0x34] sm:$0x1]
      %v1237 = vld [vmem:[%s512 + $0x38] sm:$0xf]
      %v1238 = vld [vmem:[%s512 + $0x3c] sm:$0x1]
      %v1239 = vld [vmem:[%s522] sm:$0xf]
      %v1240 = vld [vmem:[%s522 + $0x4] sm:$0xf]
      %v1241 = vld [vmem:[%s522 + $0x8] sm:$0xf]
      %v1242 = vld [vmem:[%s522 + $0xc] sm:$0xf]
      %v1243 = vld [vmem:[%s522 + $0x10] sm:$0xf]
      %v1244 = vld [vmem:[%s522 + $0x14] sm:$0xf]
      %v1245 = vld [vmem:[%s522 + $0x18] sm:$0xf]
      %v1246 = vld [vmem:[%s522 + $0x1c] sm:$0xf]
      %s1247 = scalar_lea.vmem %s6, 12
      %v1248 = vld [vmem:[%s1247] sm:$0x3]
      %v1257 = vunpack.c.l.b16 %v1223
      %v1258 = vunpack.c.l.b16 %v1225
      %v1259 = vunpack.c.l.b16 %v1227
      %v1260 = vunpack.c.l.b16 %v1229
      %v1261 = vunpack.c.l.b16 %v1231
      %v1262 = vunpack.c.l.b16 %v1233
      %v1263 = vunpack.c.l.b16 %v1235
      %v1264 = vunpack.c.l.b16 %v1237
      %v1265 = vpack.c.b16 %v1258, %v1257
      %v1266 = vpack.c.b16 %v1260, %v1259
      %v1267 = vpack.c.b16 %v1262, %v1261
      %v1268 = vpack.c.b16 %v1264, %v1263
      %v1270 = vsel %vm582, %v1265, 0
      %v1273 = vsel %vm582, %v1266, 0
      %v1276 = vsel %vm582, %v1267, 0
      %v1279 = vsel %vm582, %v1268, 0
      %v1282 = vsel %vm595, %v1248, 0
      %1284 = vmatpush.bf16.msra.mxu0 0
      %1285 = vmatpush.bf16.msra.mxu0 0
      %1286 = vmatpush.bf16.msra.mxu0 0
      %1287 = vmatpush.bf16.msra.mxu0 0
      %1288 = vmatpush.bf16.msra.mxu0 0
      %1289 = vmatpush.bf16.msra.mxu0 0
      %1290 = vmatpush.bf16.msra.mxu0 0
      %1291 = vmatpush.bf16.msra.mxu0 %v1282
      %1292 = vmatmul.bf16.gmra.mxu0 %v1270
      %v1293 = vpop.f32.mrf.mxu0
      %v1294 = vadd.f32 0.0, %v1293
      %v1295 = vpop.f32.mrf.mxu0
      %v1296 = vadd.f32 0.0, %v1295
      %1297 = vmatmul.bf16.gmra.mxu0 %v1273
      %v1298 = vpop.f32.mrf.mxu0
      %v1299 = vadd.f32 0.0, %v1298
      %v1300 = vpop.f32.mrf.mxu0
      %v1301 = vadd.f32 0.0, %v1300
      %1302 = vmatmul.bf16.gmra.mxu0 %v1276
      %v1303 = vpop.f32.mrf.mxu0
      %v1304 = vadd.f32 0.0, %v1303
      %v1305 = vpop.f32.mrf.mxu0
      %v1306 = vadd.f32 0.0, %v1305
      %1307 = vmatmul.bf16.gmra.mxu0 %v1279
      %v1308 = vpop.f32.mrf.mxu0
      %v1309 = vadd.f32 0.0, %v1308
      %v1310 = vpop.f32.mrf.mxu0
      %v1311 = vadd.f32 0.0, %v1310
      %1312 = vdwg.mxu0
      %v1313 = vadd.f32 %v1215, %v1294
      %v1314 = vadd.f32 %v1216, %v1296
      %v1315 = vadd.f32 %v1217, %v1299
      %v1316 = vadd.f32 %v1218, %v1301
      %v1317 = vadd.f32 %v1219, %v1304
      %v1318 = vadd.f32 %v1220, %v1306
      %v1319 = vadd.f32 %v1221, %v1309
      %v1320 = vadd.f32 %v1222, %v1311
      %s1321 = scalar_lea.vmem %s6, 14
      %v1322 = vld [vmem:[%s1321] sm:$0x3]
      %v1331 = vunpack.c.l.b16 %v1239
      %v1332 = vunpack.c.l.b16 %v1240
      %v1333 = vunpack.c.l.b16 %v1241
      %v1334 = vunpack.c.l.b16 %v1242
      %v1335 = vunpack.c.l.b16 %v1243
      %v1336 = vunpack.c.l.b16 %v1244
      %v1337 = vunpack.c.l.b16 %v1245
      %v1338 = vunpack.c.l.b16 %v1246
      %v1339 = vpack.c.b16 %v1332, %v1331
      %v1340 = vpack.c.b16 %v1334, %v1333
      %v1341 = vpack.c.b16 %v1336, %v1335
      %v1342 = vpack.c.b16 %v1338, %v1337
      %v1344 = vsel %vm582, %v1339, 0
      %v1347 = vsel %vm582, %v1340, 0
      %v1350 = vsel %vm582, %v1341, 0
      %v1353 = vsel %vm582, %v1342, 0
      %v1356 = vsel %vm595, %v1322, 0
      %1358 = vmatpush.bf16.msra.mxu0 0
      %1359 = vmatpush.bf16.msra.mxu0 0
      %1360 = vmatpush.bf16.msra.mxu0 0
      %1361 = vmatpush.bf16.msra.mxu0 0
      %1362 = vmatpush.bf16.msra.mxu0 0
      %1363 = vmatpush.bf16.msra.mxu0 0
      %1364 = vmatpush.bf16.msra.mxu0 0
      %1365 = vmatpush.bf16.msra.mxu0 %v1356
      %1366 = vmatmul.bf16.gmra.mxu0 %v1344
      %v1367 = vpop.f32.mrf.mxu0
      %v1368 = vadd.f32 0.0, %v1367
      %v1369 = vpop.f32.mrf.mxu0
      %v1370 = vadd.f32 0.0, %v1369
      %1371 = vmatmul.bf16.gmra.mxu0 %v1347
      %v1372 = vpop.f32.mrf.mxu0
      %v1373 = vadd.f32 0.0, %v1372
      %v1374 = vpop.f32.mrf.mxu0
      %v1375 = vadd.f32 0.0, %v1374
      %1376 = vmatmul.bf16.gmra.mxu0 %v1350
      %v1377 = vpop.f32.mrf.mxu0
      %v1378 = vadd.f32 0.0, %v1377
      %v1379 = vpop.f32.mrf.mxu0
      %v1380 = vadd.f32 0.0, %v1379
      %1381 = vmatmul.bf16.gmra.mxu0 %v1353
      %v1382 = vpop.f32.mrf.mxu0
      %v1383 = vadd.f32 0.0, %v1382
      %v1384 = vpop.f32.mrf.mxu0
      %v1385 = vadd.f32 0.0, %v1384
      %1386 = vdwg.mxu0
      %v1387 = vadd.f32 %v1313, %v1368
      %v1388 = vadd.f32 %v1314, %v1370
      %v1389 = vadd.f32 %v1315, %v1373
      %v1390 = vadd.f32 %v1316, %v1375
      %v1391 = vadd.f32 %v1317, %v1378
      %v1392 = vadd.f32 %v1318, %v1380
      %v1393 = vadd.f32 %v1319, %v1383
      %v1394 = vadd.f32 %v1320, %v1385
      %v1396 = vshrl.u32 %v1223, 16
      %v1398 = vrot.slane %v1396, 4
      %v1399 = vshll.u32 %v1223, 16
      %v1401 = vrot.slane %v1399, 5
      %v1402 = vor.u32 %v1398, %v1401
      %v1403 = vrot.slane %v1402, 4
      %v1405 = vshll.u32 %v1224, 16
      %v1407 = vrot.slane %v1405, 5
      %v1408 = vsel %vm694, %v1403, %v1407
      %v1410 = vshrl.u32 %v1225, 16
      %v1412 = vrot.slane %v1410, 4
      %v1413 = vshll.u32 %v1225, 16
      %v1415 = vrot.slane %v1413, 5
      %v1416 = vor.u32 %v1412, %v1415
      %v1417 = vrot.slane %v1416, 4
      %v1419 = vshll.u32 %v1226, 16
      %v1421 = vrot.slane %v1419, 5
      %v1422 = vsel %vm694, %v1417, %v1421
      %v1424 = vshrl.u32 %v1227, 16
      %v1426 = vrot.slane %v1424, 4
      %v1427 = vshll.u32 %v1227, 16
      %v1429 = vrot.slane %v1427, 5
      %v1430 = vor.u32 %v1426, %v1429
      %v1431 = vrot.slane %v1430, 4
      %v1433 = vshll.u32 %v1228, 16
      %v1435 = vrot.slane %v1433, 5
      %v1436 = vsel %vm694, %v1431, %v1435
      %v1438 = vshrl.u32 %v1229, 16
      %v1440 = vrot.slane %v1438, 4
      %v1441 = vshll.u32 %v1229, 16
      %v1443 = vrot.slane %v1441, 5
      %v1444 = vor.u32 %v1440, %v1443
      %v1445 = vrot.slane %v1444, 4
      %v1447 = vshll.u32 %v1230, 16
      %v1449 = vrot.slane %v1447, 5
      %v1450 = vsel %vm694, %v1445, %v1449
      %v1452 = vshrl.u32 %v1231, 16
      %v1454 = vrot.slane %v1452, 4
      %v1455 = vshll.u32 %v1231, 16
      %v1457 = vrot.slane %v1455, 5
      %v1458 = vor.u32 %v1454, %v1457
      %v1459 = vrot.slane %v1458, 4
      %v1461 = vshll.u32 %v1232, 16
      %v1463 = vrot.slane %v1461, 5
      %v1464 = vsel %vm694, %v1459, %v1463
      %v1466 = vshrl.u32 %v1233, 16
      %v1468 = vrot.slane %v1466, 4
      %v1469 = vshll.u32 %v1233, 16
      %v1471 = vrot.slane %v1469, 5
      %v1472 = vor.u32 %v1468, %v1471
      %v1473 = vrot.slane %v1472, 4
      %v1475 = vshll.u32 %v1234, 16
      %v1477 = vrot.slane %v1475, 5
      %v1478 = vsel %vm694, %v1473, %v1477
      %v1480 = vshrl.u32 %v1235, 16
      %v1482 = vrot.slane %v1480, 4
      %v1483 = vshll.u32 %v1235, 16
      %v1485 = vrot.slane %v1483, 5
      %v1486 = vor.u32 %v1482, %v1485
      %v1487 = vrot.slane %v1486, 4
      %v1489 = vshll.u32 %v1236, 16
      %v1491 = vrot.slane %v1489, 5
      %v1492 = vsel %vm694, %v1487, %v1491
      %v1494 = vshrl.u32 %v1237, 16
      %v1496 = vrot.slane %v1494, 4
      %v1497 = vshll.u32 %v1237, 16
      %v1499 = vrot.slane %v1497, 5
      %v1500 = vor.u32 %v1496, %v1499
      %v1501 = vrot.slane %v1500, 4
      %v1503 = vshll.u32 %v1238, 16
      %v1505 = vrot.slane %v1503, 5
      %v1506 = vsel %vm694, %v1501, %v1505
      %s1507 = scalar_lea.vmem %s6, 16
      %v1508 = vld [vmem:[%s1507] sm:$0x3]
      %v1509 = vunpack.c.l.b16 %v1408
      %v1510 = vunpack.c.l.b16 %v1422
      %v1511 = vunpack.c.l.b16 %v1436
      %v1512 = vunpack.c.l.b16 %v1450
      %v1513 = vunpack.c.l.b16 %v1464
      %v1514 = vunpack.c.l.b16 %v1478
      %v1515 = vunpack.c.l.b16 %v1492
      %v1516 = vunpack.c.l.b16 %v1506
      %v1517 = vpack.c.b16 %v1510, %v1509
      %v1518 = vpack.c.b16 %v1512, %v1511
      %v1519 = vpack.c.b16 %v1514, %v1513
      %v1520 = vpack.c.b16 %v1516, %v1515
      %v1522 = vsel %vm582, %v1517, 0
      %v1525 = vsel %vm582, %v1518, 0
      %v1528 = vsel %vm582, %v1519, 0
      %v1531 = vsel %vm582, %v1520, 0
      %v1534 = vsel %vm595, %v1508, 0
      %1536 = vmatpush.bf16.msra.mxu0 0
      %1537 = vmatpush.bf16.msra.mxu0 0
      %1538 = vmatpush.bf16.msra.mxu0 0
      %1539 = vmatpush.bf16.msra.mxu0 0
      %1540 = vmatpush.bf16.msra.mxu0 0
      %1541 = vmatpush.bf16.msra.mxu0 0
      %1542 = vmatpush.bf16.msra.mxu0 0
      %1543 = vmatpush.bf16.msra.mxu0 %v1534
      %1544 = vmatmul.bf16.gmra.mxu0 %v1522
      %v1545 = vpop.f32.mrf.mxu0
      %v1546 = vadd.f32 0.0, %v1545
      %v1547 = vpop.f32.mrf.mxu0
      %v1548 = vadd.f32 0.0, %v1547
      %1549 = vmatmul.bf16.gmra.mxu0 %v1525
      %v1550 = vpop.f32.mrf.mxu0
      %v1551 = vadd.f32 0.0, %v1550
      %v1552 = vpop.f32.mrf.mxu0
      %v1553 = vadd.f32 0.0, %v1552
      %1554 = vmatmul.bf16.gmra.mxu0 %v1528
      %v1555 = vpop.f32.mrf.mxu0
      %v1556 = vadd.f32 0.0, %v1555
      %v1557 = vpop.f32.mrf.mxu0
      %v1558 = vadd.f32 0.0, %v1557
      %1559 = vmatmul.bf16.gmra.mxu0 %v1531
      %v1560 = vpop.f32.mrf.mxu0
      %v1561 = vadd.f32 0.0, %v1560
      %v1562 = vpop.f32.mrf.mxu0
      %v1563 = vadd.f32 0.0, %v1562
      %1564 = vdwg.mxu0
      %v1565 = vadd.f32 %v1387, %v1546
      %v1566 = vadd.f32 %v1388, %v1548
      %v1567 = vadd.f32 %v1389, %v1551
      %v1568 = vadd.f32 %v1390, %v1553
      %v1569 = vadd.f32 %v1391, %v1556
      %v1570 = vadd.f32 %v1392, %v1558
      %v1571 = vadd.f32 %v1393, %v1561
      %v1572 = vadd.f32 %v1394, %v1563
      %v1573 = vld [vmem:[%s7] sm:$0x1]
      %v1575 = vperm.slane %v1573, 0
      %v1577 = vadd.f32 %v1565, %v1575
      %v1578 = vadd.f32 %v1566, %v1575
      %v1579 = vadd.f32 %v1567, %v1575
      %v1580 = vadd.f32 %v1568, %v1575
      %v1581 = vadd.f32 %v1569, %v1575
      %v1582 = vadd.f32 %v1570, %v1575
      %v1583 = vadd.f32 %v1571, %v1575
      %v1584 = vadd.f32 %v1572, %v1575
      %1585 = vst.msk [vmem:[%s532] sm:$0xff] %vm582, %v1577
      %1586 = vst.msk [vmem:[%s532 + $0x8] sm:$0xff] %vm582, %v1578
      %1587 = vst.msk [vmem:[%s532 + $0x10] sm:$0xff] %vm582, %v1579
      %1588 = vst.msk [vmem:[%s532 + $0x18] sm:$0xff] %vm582, %v1580
      %1589 = vst.msk [vmem:[%s532 + $0x20] sm:$0xff] %vm582, %v1581
      %1590 = vst.msk [vmem:[%s532 + $0x28] sm:$0xff] %vm582, %v1582
      %1591 = vst.msk [vmem:[%s532 + $0x30] sm:$0xff] %vm582, %v1583
      %1592 = vst.msk [vmem:[%s532 + $0x38] sm:$0xff] %vm582, %v1584
      %s1593 = smul.u32 8, %s24
      %p1594 = scmp.lt.s32.totalorder %s23, 1
      %s1595 = scalar_select %p1594, %s23, 1
      %p1596 = scmp.lt.s32.totalorder %s1593, 7
      %s1597 = scalar_select %p1596, %s1593, 7
      %s1598 = smul.addr %s1595, 8
      %s1599 = sadd.s32 %s1597, %s1598
      %s1600 = smul.addr %s1599, 8
      %s1601 = scalar_lea.vmem %s8, %s1600
      // Predicated region
      $region53: #{downsample_forward.1} parent=51 // pred_check
        %p1602 = pneg %p261
      $region54: #{downsample_forward.1} parent=51 // pred_check_branch
        %1604 = sbr.rel (%p1602) target = $region56
      $region55: #{downsample_forward.1} parent=51 // pred_region
        %s1605 = smul.u32 8, %s24
      $region56: #{downsample_forward.1} parent=51 // pred_fallthru
        _
    $region52: #{downsample_forward.1} parent=5 // pred_fallthru
      _
    %p1606 = scmp.le.s32.totalorder 2, %s14
    // Predicated region
    $region57: #{downsample_forward.1} parent=5 // pred_check
      %p1607 = pneg %p1606
    $region58: #{downsample_forward.1} parent=5 // pred_check_branch
      %1609 = sbr.rel (%p1607) target = $region60
    $region59: #{downsample_forward.1} parent=5 // pred_region
      %s1610 = ssub.s32 %s14, 2
      // Predicated region
      $region61: #{downsample_forward.1} parent=59 // pred_check
        %p1611 = pneg %p267
      $region62: #{downsample_forward.1} parent=59 // pred_check_branch
        %1613 = sbr.rel (%p1611) target = $region64
      $region63: #{downsample_forward.1} parent=59 // pred_region
        %s1614 = smul.u32 8, %s26
        %p1615 = scmp.lt.s32.totalorder %s25, 1
        %s1616 = scalar_select %p1615, %s25, 1
        %p1617 = scmp.lt.s32.totalorder %s1614, 7
        %s1618 = scalar_select %p1617, %s1614, 7
        %s1619 = smul.addr %s1616, 8
        %s1620 = sadd.s32 %s1618, %s1619
        %s1621 = smul.addr %s1620, 8
        %s1622 = scalar_lea.vmem %s8, %s1621
      $region64: #{downsample_forward.1} parent=59 // pred_fallthru
        _
    $region60: #{downsample_forward.1} parent=5 // pred_fallthru
      _
  $region6: #{downsample_forward.1} parent=0 // loop_footer
    %s18 = sadd.s32 1, %s14
  $region7: #{downsample_forward.1} parent=0 // loop_footer_branch
    %13 = sbr.rel target = $region3
  $region8: #{downsample_forward.1} parent=0 // loop_exit
    _

</llo_original>
